<compile_context>
chip_gen: v5e
topology: v5e:2x2
jax: 0.10.0
libtpu: 0.0.40
codegen_flags: <defaults>
</compile_context>

<pallas_src>
import jax
import jax.numpy as jnp
from jax.experimental import pallas as pl
from jax.experimental.pallas import tpu as pltpu


def _double_conv_kernel(x_ref, w1_ref, b1_ref, w2_ref, b2_ref, o_ref, pad_ref):
    # x_ref:  (1, H+2, W+2, Cin)   zero-padded input for this batch element
    # w1_ref: (9*Cin, Cmid)        conv1 weight, im2col layout, BN1 scale folded
    # b1_ref: (1, Cmid)            folded BN1 bias
    # w2_ref: (9*Cmid, Cout)       conv2 weight, im2col layout, BN2 scale folded
    # b2_ref: (1, Cout)            folded BN2 bias
    # o_ref:  (1, H, W, Cout)
    # pad_ref: VMEM (H+2, W+2, Cmid) persistent scratch for the padded
    #          intermediate activation.
    H = o_ref.shape[1]
    W = o_ref.shape[2]
    Cmid = pad_ref.shape[2]

    x = x_ref[0]                                   # (H+2, W+2, Cin)
    cin = x.shape[-1]

    # ---- conv1 as a single im2col matmul (K = 9*Cin) -----------------------
    patches1 = jnp.concatenate(
        [x[dy:dy + H, dx:dx + W, :].reshape(H * W, cin)
         for dy in range(3) for dx in range(3)],
        axis=-1)                                   # (H*W, 9*Cin)
    acc1 = jnp.dot(patches1, w1_ref[...], preferred_element_type=jnp.float32)

    # ---- BN1 (scale already folded into w1) + ReLU -------------------------
    y1 = jnp.maximum(acc1 + b1_ref[0], 0.0)        # (H*W, Cmid), f32

    # ---- re-pad intermediate in VMEM: zero only the 1-px border ------------
    # (interior is fully overwritten each step; border-only zeroing is cheap
    #  and stays correct even if the batch grid axis is split across cores)
    zrow = jnp.zeros((1, W + 2, Cmid), dtype=pad_ref.dtype)
    zcol = jnp.zeros((H + 2, 1, Cmid), dtype=pad_ref.dtype)
    pad_ref[0:1, :, :] = zrow
    pad_ref[H + 1:H + 2, :, :] = zrow
    pad_ref[:, 0:1, :] = zcol
    pad_ref[:, W + 1:W + 2, :] = zcol
    pad_ref[1:H + 1, 1:W + 1, :] = y1.reshape(H, W, Cmid).astype(pad_ref.dtype)
    h = pad_ref[...]                               # (H+2, W+2, Cmid)

    # ---- conv2 as a single im2col matmul (K = 9*Cmid) -----------------------
    patches2 = jnp.concatenate(
        [h[dy:dy + H, dx:dx + W, :].reshape(H * W, Cmid)
         for dy in range(3) for dx in range(3)],
        axis=-1)                                   # (H*W, 9*Cmid)
    acc2 = jnp.dot(patches2, w2_ref[...], preferred_element_type=jnp.float32)

    # ---- BN2 (scale folded) + ReLU ------------------------------------------
    y2 = jnp.maximum(acc2 + b2_ref[0], 0.0)        # (H*W, Cout), f32
    o_ref[0] = y2.reshape(H, W, y2.shape[-1]).astype(o_ref.dtype)


def fold_bn_into_weights(params, eps=1e-5):
    """One-time weight prep (do NOT redo this per forward call in a real model).

    PyTorch OIHW conv weights -> im2col (9*Cin, Cout) layout matching the
    kernel's (dy, dx, ci) concat order, with the BN scale folded in exactly
    (it is a per-output-channel scale).  Returns f32 tensors.
    """
    w1, g1, beta1, mean1, var1, w2, g2, beta2, mean2, var2 = params
    Cmid, Cin = w1.shape[0], w1.shape[1]
    Cout = w2.shape[0]

    inv1 = g1 / jnp.sqrt(var1 + eps)               # (Cmid,)
    inv2 = g2 / jnp.sqrt(var2 + eps)               # (Cout,)

    # (co, ci, ky, kx) -> (ky, kx, ci, co) -> (9*ci, co)
    w1_mat = jnp.transpose(w1, (2, 3, 1, 0)).reshape(9 * Cin, Cmid) * inv1[None, :]
    w2_mat = jnp.transpose(w2, (2, 3, 1, 0)).reshape(9 * Cmid, Cout) * inv2[None, :]
    b1 = (beta1 - mean1 * inv1).reshape(1, Cmid)
    b2 = (beta2 - mean2 * inv2).reshape(1, Cout)
    return (w1_mat.astype(jnp.float32), b1.astype(jnp.float32),
            w2_mat.astype(jnp.float32), b2.astype(jnp.float32))


def double_conv(x_nchw, folded_params, *, compute_dtype=jnp.float32):
    """x_nchw: (N, Cin, H, W) float32. Returns (N, Cout, H, W) float32.

    compute_dtype=jnp.bfloat16 casts the MXU operands (activations + weights)
    to bf16 while keeping f32 accumulation and f32 BN/ReLU — recommended for
    v6e / v7x throughput; default f32 preserves exact module numerics.
    """
    w1_mat, b1, w2_mat, b2 = folded_params
    N, Cin, H, W = x_nchw.shape
    Cmid = w1_mat.shape[1]
    Cout = w2_mat.shape[1]

    # Glue: NCHW -> NHWC, spatial zero pad by 1, cast MXU operands.
    x_nhwc = jnp.transpose(x_nchw, (0, 2, 3, 1))
    x_pad = jnp.pad(x_nhwc, ((0, 0), (1, 1), (1, 1), (0, 0))).astype(compute_dtype)
    w1c = w1_mat.astype(compute_dtype)
    w2c = w2_mat.astype(compute_dtype)

    itemsize = jnp.dtype(compute_dtype).itemsize
    # Rough per-step VMEM budget: double-buffered in/out blocks + scratch +
    # weights/biases + the two im2col slabs, with 2x headroom (>=16 MiB).
    est_bytes = (2 * (H + 2) * (W + 2) * Cin * itemsize
                 + 2 * H * W * Cout * 4
                 + (H + 2) * (W + 2) * Cmid * itemsize
                 + (9 * Cin * Cmid + 9 * Cmid * Cout) * itemsize
                 + (Cmid + Cout) * 4
                 + H * W * (9 * Cin + 9 * Cmid) * 4)
    vmem_limit = int(max(2 * est_bytes, 16 * 1024 * 1024))

    flops = 2 * N * H * W * 9 * (Cin * Cmid + Cmid * Cout)
    bytes_accessed = (x_pad.size * itemsize
                      + N * H * W * Cout * 4
                      + (w1c.size + w2c.size) * itemsize
                      + (b1.size + b2.size) * 4)

    out_nhwc = pl.pallas_call(
        _double_conv_kernel,
        out_shape=jax.ShapeDtypeStruct((N, H, W, Cout), jnp.float32),
        grid_spec=pltpu.PrefetchScalarGridSpec(
            num_scalar_prefetch=0,
            grid=(N,),
            in_specs=[
                pl.BlockSpec((1, H + 2, W + 2, Cin), lambda n: (n, 0, 0, 0)),
                pl.BlockSpec((9 * Cin, Cmid), lambda n: (0, 0)),
                pl.BlockSpec((1, Cmid), lambda n: (0, 0)),
                pl.BlockSpec((9 * Cmid, Cout), lambda n: (0, 0)),
                pl.BlockSpec((1, Cout), lambda n: (0, 0)),
            ],
            out_specs=pl.BlockSpec((1, H, W, Cout), lambda n: (n, 0, 0, 0)),
            scratch_shapes=[pltpu.VMEM((H + 2, W + 2, Cmid), compute_dtype)],
        ),
        compiler_params=pltpu.CompilerParams(
            dimension_semantics=("parallel",),
            vmem_limit_bytes=vmem_limit),
        cost_estimate=pl.CostEstimate(flops=flops, transcendentals=0,
                                      bytes_accessed=bytes_accessed),
    )(x_pad, w1c, b1, w2c, b2)

    # Glue: NHWC -> NCHW to match the PyTorch output convention.
    return jnp.transpose(out_nhwc, (0, 3, 1, 2))


def _reference(x_nchw, params, eps=1e-5):
    """Pure-JAX reference (lax conv) for correctness checking."""
    w1, g1, beta1, mean1, var1, w2, g2, beta2, mean2, var2 = params

    def conv(x, w):
        return jax.lax.conv_general_dilated(
            x, w, window_strides=(1, 1), padding=((1, 1), (1, 1)),
            dimension_numbers=("NCHW", "OIHW", "NCHW"))

    def bn(x, g, b, m, v):
        return (x - m[None, :, None, None]) / jnp.sqrt(v[None, :, None, None] + eps) \
            * g[None, :, None, None] + b[None, :, None, None]

    y = jax.nn.relu(bn(conv(x_nchw, w1), g1, beta1, mean1, var1))
    y = jax.nn.relu(bn(conv(y, w2), g2, beta2, mean2, var2))
    return y


if __name__ == "__main__":
    N, Cin, Cout, H, W = 2, 4, 8, 16, 16
    key = jax.random.PRNGKey(0)
    k = jax.random.split(key, 8)

    x = jax.random.normal(k[0], (N, Cin, H, W), dtype=jnp.float32)

    # Conv weights (PyTorch OIHW layout), BN params — deterministic synthetic init.
    w1 = jax.random.normal(k[1], (Cout, Cin, 3, 3), dtype=jnp.float32) * 0.1
    w2 = jax.random.normal(k[2], (Cout, Cout, 3, 3), dtype=jnp.float32) * 0.1
    g1 = 1.0 + 0.1 * jax.random.normal(k[3], (Cout,), dtype=jnp.float32)
    beta1 = 0.1 * jax.random.normal(k[4], (Cout,), dtype=jnp.float32)
    mean1 = 0.05 * jax.random.normal(k[5], (Cout,), dtype=jnp.float32)
    var1 = jnp.abs(1.0 + 0.1 * jax.random.normal(k[6], (Cout,), dtype=jnp.float32))
    g2 = jnp.ones((Cout,), jnp.float32) * 0.9
    beta2 = jnp.full((Cout,), 0.02, jnp.float32)
    mean2 = jnp.full((Cout,), -0.01, jnp.float32)
    var2 = jnp.full((Cout,), 1.1, jnp.float32)

    params = (w1, g1, beta1, mean1, var1, w2, g2, beta2, mean2, var2)

    # One-time weight/BN folding, then a jitted forward.
    folded = fold_bn_into_weights(params)
    fwd = jax.jit(double_conv)

    out = fwd(x, folded)
    out = jax.block_until_ready(out)

    ref = _reference(x, params)
    assert out.shape == (N, Cout, H, W)
    assert jnp.allclose(out, ref, atol=1e-3, rtol=1e-3)

    print("KERNEL_OK")
</pallas_src>

<mosaic_0001>
module attributes {stable_mosaic.version = 11 : i64} {
  func.func @_double_conv_kernel(%arg0: i32, %arg1: memref<1x18x18x4xf32, #tpu.memory_space<vmem>>, %arg2: memref<36x8xf32, #tpu.memory_space<vmem>>, %arg3: memref<1x8xf32, #tpu.memory_space<vmem>>, %arg4: memref<72x8xf32, #tpu.memory_space<vmem>>, %arg5: memref<1x8xf32, #tpu.memory_space<vmem>>, %arg6: memref<1x16x16x8xf32, #tpu.memory_space<vmem>>, %arg7: memref<18x18x8xf32, #tpu.memory_space<vmem>>) attributes {dimension_semantics = [#tpu.dimension_semantics<parallel>], iteration_bounds = array<i64: 2>, scalar_prefetch = 0 : i64, scratch_operands = 1 : i64, tpu.core_type = #tpu.core_type<tc>, window_params = [{transform_indices = @transform_0, window_bounds = array<i64: 1, 18, 18, 4>}, {pipeline_mode = #tpu.pipeline_mode<synchronous>, transform_indices = @transform_1, window_bounds = array<i64: 36, 8>}, {pipeline_mode = #tpu.pipeline_mode<synchronous>, transform_indices = @transform_2, window_bounds = array<i64: 1, 8>}, {pipeline_mode = #tpu.pipeline_mode<synchronous>, transform_indices = @transform_3, window_bounds = array<i64: 72, 8>}, {pipeline_mode = #tpu.pipeline_mode<synchronous>, transform_indices = @transform_4, window_bounds = array<i64: 1, 8>}, {transform_indices = @transform_5, window_bounds = array<i64: 1, 16, 16, 8>}]} {
    %c0 = arith.constant 0 : index
    %c0_0 = arith.constant 0 : index
    %c0_1 = arith.constant 0 : index
    %c0_2 = arith.constant 0 : index
    %0 = vector.load %arg1[%c0, %c0_0, %c0_1, %c0_2] : memref<1x18x18x4xf32, #tpu.memory_space<vmem>>, vector<1x18x18x4xf32>
    %1 = vector.shape_cast %0 : vector<1x18x18x4xf32> to vector<18x18x4xf32>
    %2 = vector.extract_strided_slice %1 {offsets = [0, 0, 0], sizes = [16, 16, 4], strides = [1, 1, 1]} : vector<18x18x4xf32> to vector<16x16x4xf32>
    %3 = vector.shape_cast %2 : vector<16x16x4xf32> to vector<256x4xf32>
    %4 = vector.extract_strided_slice %1 {offsets = [0, 1, 0], sizes = [16, 16, 4], strides = [1, 1, 1]} : vector<18x18x4xf32> to vector<16x16x4xf32>
    %5 = vector.shape_cast %4 : vector<16x16x4xf32> to vector<256x4xf32>
    %6 = vector.extract_strided_slice %1 {offsets = [0, 2, 0], sizes = [16, 16, 4], strides = [1, 1, 1]} : vector<18x18x4xf32> to vector<16x16x4xf32>
    %7 = vector.shape_cast %6 : vector<16x16x4xf32> to vector<256x4xf32>
    %8 = vector.extract_strided_slice %1 {offsets = [1, 0, 0], sizes = [16, 16, 4], strides = [1, 1, 1]} : vector<18x18x4xf32> to vector<16x16x4xf32>
    %9 = vector.shape_cast %8 : vector<16x16x4xf32> to vector<256x4xf32>
    %10 = vector.extract_strided_slice %1 {offsets = [1, 1, 0], sizes = [16, 16, 4], strides = [1, 1, 1]} : vector<18x18x4xf32> to vector<16x16x4xf32>
    %11 = vector.shape_cast %10 : vector<16x16x4xf32> to vector<256x4xf32>
    %12 = vector.extract_strided_slice %1 {offsets = [1, 2, 0], sizes = [16, 16, 4], strides = [1, 1, 1]} : vector<18x18x4xf32> to vector<16x16x4xf32>
    %13 = vector.shape_cast %12 : vector<16x16x4xf32> to vector<256x4xf32>
    %14 = vector.extract_strided_slice %1 {offsets = [2, 0, 0], sizes = [16, 16, 4], strides = [1, 1, 1]} : vector<18x18x4xf32> to vector<16x16x4xf32>
    %15 = vector.shape_cast %14 : vector<16x16x4xf32> to vector<256x4xf32>
    %16 = vector.extract_strided_slice %1 {offsets = [2, 1, 0], sizes = [16, 16, 4], strides = [1, 1, 1]} : vector<18x18x4xf32> to vector<16x16x4xf32>
    %17 = vector.shape_cast %16 : vector<16x16x4xf32> to vector<256x4xf32>
    %18 = vector.extract_strided_slice %1 {offsets = [2, 2, 0], sizes = [16, 16, 4], strides = [1, 1, 1]} : vector<18x18x4xf32> to vector<16x16x4xf32>
    %19 = vector.shape_cast %18 : vector<16x16x4xf32> to vector<256x4xf32>
    %20 = tpu.concatenate %3, %5, %7, %9, %11, %13, %15, %17, %19 in 1 : vector<256x4xf32>, vector<256x4xf32>, vector<256x4xf32>, vector<256x4xf32>, vector<256x4xf32>, vector<256x4xf32>, vector<256x4xf32>, vector<256x4xf32>, vector<256x4xf32> -> vector<256x36xf32>
    %c0_3 = arith.constant 0 : index
    %c0_4 = arith.constant 0 : index
    %21 = vector.load %arg2[%c0_3, %c0_4] : memref<36x8xf32, #tpu.memory_space<vmem>>, vector<36x8xf32>
    %cst = arith.constant dense<0.000000e+00> : vector<256x8xf32>
    %22 = tpu.matmul %20, %21, %cst {dimension_numbers = #tpu.dot_dimension_numbers<[1], [0], [0], [1], [0, 0, 1, 1], [], []>} : vector<256x36xf32>, vector<36x8xf32>, vector<256x8xf32> -> vector<256x8xf32>
    %c0_5 = arith.constant 0 : index
    %c0_6 = arith.constant 0 : index
    %23 = vector.load %arg3[%c0_5, %c0_6] : memref<1x8xf32, #tpu.memory_space<vmem>>, vector<1x8xf32>
    %24 = vector.shape_cast %23 : vector<1x8xf32> to vector<8xf32>
    %25 = vector.shape_cast %24 : vector<8xf32> to vector<1x8xf32>
    %26 = vector.broadcast %25 : vector<1x8xf32> to vector<256x8xf32>
    %27 = arith.addf %22, %26 : vector<256x8xf32>
    %cst_7 = arith.constant 0.000000e+00 : f32
    %28 = vector.broadcast %cst_7 : f32 to vector<256x8xf32>
    %29 = arith.maximumf %27, %28 : vector<256x8xf32>
    %cst_8 = arith.constant 0.000000e+00 : f32
    %30 = vector.broadcast %cst_8 : f32 to vector<1x18x8xf32>
    %cst_9 = arith.constant 0.000000e+00 : f32
    %31 = vector.broadcast %cst_9 : f32 to vector<18x1x8xf32>
    %c0_10 = arith.constant 0 : index
    %c0_11 = arith.constant 0 : index
    %c0_12 = arith.constant 0 : index
    %32 = vector.load %arg7[%c0_10, %c0_11, %c0_12] : memref<18x18x8xf32, #tpu.memory_space<vmem>>, vector<1x18x8xf32>
    tpu.vector_store %arg7[%c0_10, %c0_11, %c0_12], %30 {strides = array<i32>} : memref<18x18x8xf32, #tpu.memory_space<vmem>>, vector<1x18x8xf32>,
    %c17 = arith.constant 17 : index
    %c0_13 = arith.constant 0 : index
    %c0_14 = arith.constant 0 : index
    %33 = vector.load %arg7[%c17, %c0_13, %c0_14] : memref<18x18x8xf32, #tpu.memory_space<vmem>>, vector<1x18x8xf32>
    tpu.vector_store %arg7[%c17, %c0_13, %c0_14], %30 {strides = array<i32>} : memref<18x18x8xf32, #tpu.memory_space<vmem>>, vector<1x18x8xf32>,
    %c0_15 = arith.constant 0 : index
    %c0_16 = arith.constant 0 : index
    %c0_17 = arith.constant 0 : index
    %34 = vector.load %arg7[%c0_15, %c0_16, %c0_17] : memref<18x18x8xf32, #tpu.memory_space<vmem>>, vector<18x1x8xf32>
    tpu.vector_store %arg7[%c0_15, %c0_16, %c0_17], %31 {strides = array<i32>} : memref<18x18x8xf32, #tpu.memory_space<vmem>>, vector<18x1x8xf32>,
    %c0_18 = arith.constant 0 : index
    %c17_19 = arith.constant 17 : index
    %c0_20 = arith.constant 0 : index
    %35 = vector.load %arg7[%c0_18, %c17_19, %c0_20] : memref<18x18x8xf32, #tpu.memory_space<vmem>>, vector<18x1x8xf32>
    tpu.vector_store %arg7[%c0_18, %c17_19, %c0_20], %31 {strides = array<i32>} : memref<18x18x8xf32, #tpu.memory_space<vmem>>, vector<18x1x8xf32>,
    %36 = vector.shape_cast %29 : vector<256x8xf32> to vector<16x16x8xf32>
    %c1 = arith.constant 1 : index
    %c1_21 = arith.constant 1 : index
    %c0_22 = arith.constant 0 : index
    %37 = vector.load %arg7[%c1, %c1_21, %c0_22] : memref<18x18x8xf32, #tpu.memory_space<vmem>>, vector<16x16x8xf32>
    tpu.vector_store %arg7[%c1, %c1_21, %c0_22], %36 {strides = array<i32>} : memref<18x18x8xf32, #tpu.memory_space<vmem>>, vector<16x16x8xf32>,
    %c0_23 = arith.constant 0 : index
    %c0_24 = arith.constant 0 : index
    %c0_25 = arith.constant 0 : index
    %38 = vector.load %arg7[%c0_23, %c0_24, %c0_25] : memref<18x18x8xf32, #tpu.memory_space<vmem>>, vector<18x18x8xf32>
    %39 = vector.extract_strided_slice %38 {offsets = [0, 0, 0], sizes = [16, 16, 8], strides = [1, 1, 1]} : vector<18x18x8xf32> to vector<16x16x8xf32>
    %40 = vector.shape_cast %39 : vector<16x16x8xf32> to vector<256x8xf32>
    %41 = vector.extract_strided_slice %38 {offsets = [0, 1, 0], sizes = [16, 16, 8], strides = [1, 1, 1]} : vector<18x18x8xf32> to vector<16x16x8xf32>
    %42 = vector.shape_cast %41 : vector<16x16x8xf32> to vector<256x8xf32>
    %43 = vector.extract_strided_slice %38 {offsets = [0, 2, 0], sizes = [16, 16, 8], strides = [1, 1, 1]} : vector<18x18x8xf32> to vector<16x16x8xf32>
    %44 = vector.shape_cast %43 : vector<16x16x8xf32> to vector<256x8xf32>
    %45 = vector.extract_strided_slice %38 {offsets = [1, 0, 0], sizes = [16, 16, 8], strides = [1, 1, 1]} : vector<18x18x8xf32> to vector<16x16x8xf32>
    %46 = vector.shape_cast %45 : vector<16x16x8xf32> to vector<256x8xf32>
    %47 = vector.extract_strided_slice %38 {offsets = [1, 1, 0], sizes = [16, 16, 8], strides = [1, 1, 1]} : vector<18x18x8xf32> to vector<16x16x8xf32>
    %48 = vector.shape_cast %47 : vector<16x16x8xf32> to vector<256x8xf32>
    %49 = vector.extract_strided_slice %38 {offsets = [1, 2, 0], sizes = [16, 16, 8], strides = [1, 1, 1]} : vector<18x18x8xf32> to vector<16x16x8xf32>
    %50 = vector.shape_cast %49 : vector<16x16x8xf32> to vector<256x8xf32>
    %51 = vector.extract_strided_slice %38 {offsets = [2, 0, 0], sizes = [16, 16, 8], strides = [1, 1, 1]} : vector<18x18x8xf32> to vector<16x16x8xf32>
    %52 = vector.shape_cast %51 : vector<16x16x8xf32> to vector<256x8xf32>
    %53 = vector.extract_strided_slice %38 {offsets = [2, 1, 0], sizes = [16, 16, 8], strides = [1, 1, 1]} : vector<18x18x8xf32> to vector<16x16x8xf32>
    %54 = vector.shape_cast %53 : vector<16x16x8xf32> to vector<256x8xf32>
    %55 = vector.extract_strided_slice %38 {offsets = [2, 2, 0], sizes = [16, 16, 8], strides = [1, 1, 1]} : vector<18x18x8xf32> to vector<16x16x8xf32>
    %56 = vector.shape_cast %55 : vector<16x16x8xf32> to vector<256x8xf32>
    %57 = tpu.concatenate %40, %42, %44, %46, %48, %50, %52, %54, %56 in 1 : vector<256x8xf32>, vector<256x8xf32>, vector<256x8xf32>, vector<256x8xf32>, vector<256x8xf32>, vector<256x8xf32>, vector<256x8xf32>, vector<256x8xf32>, vector<256x8xf32> -> vector<256x72xf32>
    %c0_26 = arith.constant 0 : index
    %c0_27 = arith.constant 0 : index
    %58 = vector.load %arg4[%c0_26, %c0_27] : memref<72x8xf32, #tpu.memory_space<vmem>>, vector<72x8xf32>
    %cst_28 = arith.constant dense<0.000000e+00> : vector<256x8xf32>
    %59 = tpu.matmul %57, %58, %cst_28 {dimension_numbers = #tpu.dot_dimension_numbers<[1], [0], [0], [1], [0, 0, 1, 1], [], []>} : vector<256x72xf32>, vector<72x8xf32>, vector<256x8xf32> -> vector<256x8xf32>
    %c0_29 = arith.constant 0 : index
    %c0_30 = arith.constant 0 : index
    %60 = vector.load %arg5[%c0_29, %c0_30] : memref<1x8xf32, #tpu.memory_space<vmem>>, vector<1x8xf32>
    %61 = vector.shape_cast %60 : vector<1x8xf32> to vector<8xf32>
    %62 = vector.shape_cast %61 : vector<8xf32> to vector<1x8xf32>
    %63 = vector.broadcast %62 : vector<1x8xf32> to vector<256x8xf32>
    %64 = arith.addf %59, %63 : vector<256x8xf32>
    %cst_31 = arith.constant 0.000000e+00 : f32
    %65 = vector.broadcast %cst_31 : f32 to vector<256x8xf32>
    %66 = arith.maximumf %64, %65 : vector<256x8xf32>
    %67 = vector.shape_cast %66 : vector<256x8xf32> to vector<16x16x8xf32>
    %c0_32 = arith.constant 0 : index
    %c0_33 = arith.constant 0 : index
    %c0_34 = arith.constant 0 : index
    %c0_35 = arith.constant 0 : index
    %68 = vector.load %arg6[%c0_32, %c0_33, %c0_34, %c0_35] : memref<1x16x16x8xf32, #tpu.memory_space<vmem>>, vector<1x16x16x8xf32>
    %69 = vector.shape_cast %68 : vector<1x16x16x8xf32> to vector<16x16x8xf32>
    %70 = vector.shape_cast %67 : vector<16x16x8xf32> to vector<1x16x16x8xf32>
    tpu.vector_store %arg6[%c0_32, %c0_33, %c0_34, %c0_35], %70 {strides = array<i32>} : memref<1x16x16x8xf32, #tpu.memory_space<vmem>>, vector<1x16x16x8xf32>,
    return
  }
  func.func @transform_0(%arg0: i32) -> (i32, i32, i32, i32) {
    %c0_i32 = arith.constant 0 : i32
    %c0_i32_0 = arith.constant 0 : i32
    %c0_i32_1 = arith.constant 0 : i32
    %c0_i32_2 = arith.constant 0 : i32
    return %arg0, %c0_i32, %c0_i32_0, %c0_i32_1 : i32, i32, i32, i32
  }
  func.func @transform_1(%arg0: i32) -> (i32, i32) {
    %c0_i32 = arith.constant 0 : i32
    %c0_i32_0 = arith.constant 0 : i32
    %c0_i32_1 = arith.constant 0 : i32
    return %c0_i32, %c0_i32_0 : i32, i32
  }
  func.func @transform_2(%arg0: i32) -> (i32, i32) {
    %c0_i32 = arith.constant 0 : i32
    %c0_i32_0 = arith.constant 0 : i32
    %c0_i32_1 = arith.constant 0 : i32
    return %c0_i32, %c0_i32_0 : i32, i32
  }
  func.func @transform_3(%arg0: i32) -> (i32, i32) {
    %c0_i32 = arith.constant 0 : i32
    %c0_i32_0 = arith.constant 0 : i32
    %c0_i32_1 = arith.constant 0 : i32
    return %c0_i32, %c0_i32_0 : i32, i32
  }
  func.func @transform_4(%arg0: i32) -> (i32, i32) {
    %c0_i32 = arith.constant 0 : i32
    %c0_i32_0 = arith.constant 0 : i32
    %c0_i32_1 = arith.constant 0 : i32
    return %c0_i32, %c0_i32_0 : i32, i32
  }
  func.func @transform_5(%arg0: i32) -> (i32, i32, i32, i32) {
    %c0_i32 = arith.constant 0 : i32
    %c0_i32_0 = arith.constant 0 : i32
    %c0_i32_1 = arith.constant 0 : i32
    %c0_i32_2 = arith.constant 0 : i32
    return %arg0, %c0_i32, %c0_i32_0, %c0_i32_1 : i32, i32, i32, i32
  }
}

</mosaic_0001>

<llo_original>
// kernel: double_conv.1
$region0: #{double_conv.1}
  #allocation0 [shape = 'u32[]', space=smem, size = 0x4, offset = 0x4, fixed_abs, tag = 'smem constant byte address 0x4 - core index']
  #allocation1 [shape = 'u32[72,128]{1,0:T(1,128)}', space=vmem, size = 0x9000, scoped, tag = 'internal scratch']
  #allocation2 [shape = 'f32[18,18,8]{2,1,0:T(8,128)}', space=vmem, size = 0x36000, scoped, tag = 'scratch operand']
  %s0 = inlined_call_operand.vmem [shape: f32[2,18,18,4], index: 0, kind: input, shape index: {}]
  %s1 = inlined_call_operand.vmem [shape: f32[36,8], index: 1, kind: input, shape index: {}]
  %s2 = inlined_call_operand.vmem [shape: f32[1,8], index: 2, kind: input, shape index: {}]
  %s3 = inlined_call_operand.vmem [shape: f32[72,8], index: 3, kind: input, shape index: {}]
  %s4 = inlined_call_operand.vmem [shape: f32[1,8], index: 4, kind: input, shape index: {}]
  %s5 = inlined_call_operand.vmem [shape: f32[2,16,16,8], index: 5, kind: output, shape index: {}]
  %s6 = sld [smem:[#allocation0]]
  $region53: #{double_conv.1} parent=0
    _
  %s8 = ssub.s32 1, %s6
  %s9 = scalar_select 0, %s8, %s6
  loop: start=0, step=1, limit=4
  $region2: #{double_conv.1} parent=0 // loop_pre_header
    _
  $region3: #{double_conv.1} parent=0 // loop_header
    %s11 = sphi 0, %s15
    %p12 = scmp.ge.s32.totalorder %s11, 4
    %s21 = sphi 0, %s23
    %s24 = sphi 0, %s21
    %s25 = sphi 0, %s24
    %s41 = sphi 0, %s25
    %s45 = sphi 0, %s45
    %s47 = sphi 0, %s45
    %s48 = sphi 0, %s47
    %s62 = sphi 0, %s48
    %s66 = sphi 0, %s66
    %s68 = sphi 0, %s66
    %s69 = sphi 0, %s68
    %s83 = sphi 0, %s69
    %s87 = sphi 0, %s87
    %s89 = sphi 0, %s87
    %s90 = sphi 0, %s89
    %s104 = sphi 0, %s90
    %s108 = sphi 0, %s108
    %s110 = sphi 0, %s108
    %s111 = sphi 0, %s110
    %s125 = sphi 0, %s111
    %s131 = sphi 0, %s133
    %s134 = sphi 0, %s131
    %s135 = sphi 0, %s134
    %s151 = sphi 0, %s135
  $region4: #{double_conv.1} parent=0 // loop_header_branch
    %14 = sbr.rel (%p12) target = $region8
  $region5: #{double_conv.1} parent=0 // loop_body
    %s16 = ssub.s32 %s11, 1
    %s17 = ssub.s32 %s11, 2
    %s18 = sadd.s32 %s11, 1
    %s19 = ssub.s32 %s11, %s18
    %p20 = scmp.eq.s32.totalorder %s19, 0
    %s22 = sadd.s32 %s21, 1
    %s23 = scalar_select %p20, %s21, %s22
    %p26 = pneg %p20
    %p27 = scmp.eq.s32.totalorder %s11, 1
    %p28 = por %p26, %p27
    %p29 = scmp.ne.s32.totalorder %s21, %s24
    %p30 = scmp.eq.s32.totalorder %s11, 0
    %p31 = por %p29, %p30
    %p32 = scmp.ne.s32.totalorder %s21, %s24
    %p33 = scmp.eq.s32.totalorder %s16, 1
    %p34 = por %p32, %p33
    %p35 = scmp.ne.s32.totalorder %s24, %s25
    %p36 = scmp.eq.s32.totalorder %s16, 0
    %p37 = por %p35, %p36
    %p38 = scmp.ne.s32.totalorder %s24, %s25
    %p39 = scmp.eq.s32.totalorder %s17, 1
    %p40 = por %p38, %p39
    %p42 = scmp.ne.s32.totalorder %s25, %s41
    %p43 = scmp.eq.s32.totalorder %s17, 0
    %p44 = por %p42, %p43
    %s46 = sadd.s32 %s45, 1
    %p49 = scmp.eq.s32.totalorder %s11, 1
    %p50 = scmp.ne.s32.totalorder %s45, %s47
    %p51 = scmp.eq.s32.totalorder %s11, 0
    %p52 = por %p50, %p51
    %p53 = scmp.ne.s32.totalorder %s45, %s47
    %p54 = scmp.eq.s32.totalorder %s16, 1
    %p55 = por %p53, %p54
    %p56 = scmp.ne.s32.totalorder %s47, %s48
    %p57 = scmp.eq.s32.totalorder %s16, 0
    %p58 = por %p56, %p57
    %p59 = scmp.ne.s32.totalorder %s47, %s48
    %p60 = scmp.eq.s32.totalorder %s17, 1
    %p61 = por %p59, %p60
    %p63 = scmp.ne.s32.totalorder %s48, %s62
    %p64 = scmp.eq.s32.totalorder %s17, 0
    %p65 = por %p63, %p64
    %s67 = sadd.s32 %s66, 1
    %p70 = scmp.eq.s32.totalorder %s11, 1
    %p71 = scmp.ne.s32.totalorder %s66, %s68
    %p72 = scmp.eq.s32.totalorder %s11, 0
    %p73 = por %p71, %p72
    %p74 = scmp.ne.s32.totalorder %s66, %s68
    %p75 = scmp.eq.s32.totalorder %s16, 1
    %p76 = por %p74, %p75
    %p77 = scmp.ne.s32.totalorder %s68, %s69
    %p78 = scmp.eq.s32.totalorder %s16, 0
    %p79 = por %p77, %p78
    %p80 = scmp.ne.s32.totalorder %s68, %s69
    %p81 = scmp.eq.s32.totalorder %s17, 1
    %p82 = por %p80, %p81
    %p84 = scmp.ne.s32.totalorder %s69, %s83
    %p85 = scmp.eq.s32.totalorder %s17, 0
    %p86 = por %p84, %p85
    %s88 = sadd.s32 %s87, 1
    %p91 = scmp.eq.s32.totalorder %s11, 1
    %p92 = scmp.ne.s32.totalorder %s87, %s89
    %p93 = scmp.eq.s32.totalorder %s11, 0
    %p94 = por %p92, %p93
    %p95 = scmp.ne.s32.totalorder %s87, %s89
    %p96 = scmp.eq.s32.totalorder %s16, 1
    %p97 = por %p95, %p96
    %p98 = scmp.ne.s32.totalorder %s89, %s90
    %p99 = scmp.eq.s32.totalorder %s16, 0
    %p100 = por %p98, %p99
    %p101 = scmp.ne.s32.totalorder %s89, %s90
    %p102 = scmp.eq.s32.totalorder %s17, 1
    %p103 = por %p101, %p102
    %p105 = scmp.ne.s32.totalorder %s90, %s104
    %p106 = scmp.eq.s32.totalorder %s17, 0
    %p107 = por %p105, %p106
    %s109 = sadd.s32 %s108, 1
    %p112 = scmp.eq.s32.totalorder %s11, 1
    %p113 = scmp.ne.s32.totalorder %s108, %s110
    %p114 = scmp.eq.s32.totalorder %s11, 0
    %p115 = por %p113, %p114
    %p116 = scmp.ne.s32.totalorder %s108, %s110
    %p117 = scmp.eq.s32.totalorder %s16, 1
    %p118 = por %p116, %p117
    %p119 = scmp.ne.s32.totalorder %s110, %s111
    %p120 = scmp.eq.s32.totalorder %s16, 0
    %p121 = por %p119, %p120
    %p122 = scmp.ne.s32.totalorder %s110, %s111
    %p123 = scmp.eq.s32.totalorder %s17, 1
    %p124 = por %p122, %p123
    %p126 = scmp.ne.s32.totalorder %s111, %s125
    %p127 = scmp.eq.s32.totalorder %s17, 0
    %p128 = por %p126, %p127
    %s129 = ssub.s32 %s11, %s18
    %p130 = scmp.eq.s32.totalorder %s129, 0
    %s132 = sadd.s32 %s131, 1
    %s133 = scalar_select %p130, %s131, %s132
    %p136 = pneg %p130
    %p137 = scmp.eq.s32.totalorder %s11, 1
    %p138 = por %p136, %p137
    %p139 = scmp.ne.s32.totalorder %s131, %s134
    %p140 = scmp.eq.s32.totalorder %s11, 0
    %p141 = por %p139, %p140
    %p142 = scmp.ne.s32.totalorder %s131, %s134
    %p143 = scmp.eq.s32.totalorder %s16, 1
    %p144 = por %p142, %p143
    %p145 = scmp.ne.s32.totalorder %s134, %s135
    %p146 = scmp.eq.s32.totalorder %s16, 0
    %p147 = por %p145, %p146
    %p148 = scmp.ne.s32.totalorder %s134, %s135
    %p149 = scmp.eq.s32.totalorder %s17, 1
    %p150 = por %p148, %p149
    %p152 = scmp.ne.s32.totalorder %s135, %s151
    %p153 = scmp.eq.s32.totalorder %s17, 0
    %p154 = por %p152, %p153
    %p155 = scmp.le.s32.totalorder 1, %s11
    %p156 = scmp.lt.s32.totalorder %s11, 3
    %p157 = pnand %p155, %p156
    %p158 = pneg %p157
    // Predicated region
    $region9: #{double_conv.1} parent=5 // pred_check
      _
    $region10: #{double_conv.1} parent=5 // pred_check_branch
      %160 = sbr.rel (%p157) target = $region12
    $region11: #{double_conv.1} parent=5 // pred_region
      %s161 = ssub.s32 %s11, 1
      // Predicated region
      $region13: #{double_conv.1} parent=11 // pred_check
        %p162 = pneg %p58
      $region14: #{double_conv.1} parent=11 // pred_check_branch
        %164 = sbr.rel (%p162) target = $region16
      $region15: #{double_conv.1} parent=11 // pred_region
        _
      $region16: #{double_conv.1} parent=11 // pred_fallthru
        _
      // Predicated region
      $region17: #{double_conv.1} parent=11 // pred_check
        %p165 = pneg %p79
      $region18: #{double_conv.1} parent=11 // pred_check_branch
        %167 = sbr.rel (%p165) target = $region20
      $region19: #{double_conv.1} parent=11 // pred_region
        _
      $region20: #{double_conv.1} parent=11 // pred_fallthru
        _
      // Predicated region
      $region21: #{double_conv.1} parent=11 // pred_check
        %p168 = pneg %p100
      $region22: #{double_conv.1} parent=11 // pred_check_branch
        %170 = sbr.rel (%p168) target = $region24
      $region23: #{double_conv.1} parent=11 // pred_region
        _
      $region24: #{double_conv.1} parent=11 // pred_fallthru
        _
      // Predicated region
      $region25: #{double_conv.1} parent=11 // pred_check
        %p171 = pneg %p121
      $region26: #{double_conv.1} parent=11 // pred_check_branch
        %173 = sbr.rel (%p171) target = $region28
      $region27: #{double_conv.1} parent=11 // pred_region
        _
      $region28: #{double_conv.1} parent=11 // pred_fallthru
        _
    $region12: #{double_conv.1} parent=5 // pred_fallthru
      _
    %p174 = scmp.lt.s32.totalorder %s11, 2
    // Predicated region
    $region29: #{double_conv.1} parent=5 // pred_check
      %p175 = pneg %p174
    $region30: #{double_conv.1} parent=5 // pred_check_branch
      %177 = sbr.rel (%p175) target = $region32
    $region31: #{double_conv.1} parent=5 // pred_region
      // Predicated region
      $region33: #{double_conv.1} parent=31 // pred_check
        %p178 = pneg %p31
      $region34: #{double_conv.1} parent=31 // pred_check_branch
        %180 = sbr.rel (%p178) target = $region36
      $region35: #{double_conv.1} parent=31 // pred_region
        %p181 = scmp.lt.s32.totalorder %s11, 1
        %s182 = scalar_select %p181, %s11, 1
        %s183 = smul.addr %s182, 54
        %s184 = smul.addr %s183, 8
        %s185 = scalar_lea.vmem %s0, %s184
      $region36: #{double_conv.1} parent=31 // pred_fallthru
        _
    $region32: #{double_conv.1} parent=5 // pred_fallthru
      _
    %p186 = scmp.le.s32.totalorder 1, %s11
    %p187 = scmp.lt.s32.totalorder %s11, 3
    %p188 = pnand %p186, %p187
    %p189 = pneg %p188
    // Predicated region
    $region37: #{double_conv.1} parent=5 // pred_check
      _
    $region38: #{double_conv.1} parent=5 // pred_check_branch
      %191 = sbr.rel (%p188) target = $region40
    $region39: #{double_conv.1} parent=5 // pred_region
      %s192 = ssub.s32 %s11, 1
      %p193 = scmp.lt.s32.totalorder %s16, 1
      %s194 = scalar_select %p193, %s16, 1
      %s195 = smul.addr %s194, 54
      %s196 = smul.addr %s195, 8
      %s197 = scalar_lea.vmem %s0, %s196
      %p198 = pneg %p37
      %p199 = pneg %p34
      %p200 = pneg %p58
      %p201 = pneg %p55
      %p202 = pneg %p79
      %p203 = pneg %p76
      %p204 = pneg %p100
      %p205 = pneg %p97
      %p206 = pneg %p121
      %p207 = pneg %p118
      %p208 = pneg %p147
      %p209 = pneg %p144
      %p210 = scmp.lt.s32.totalorder %s16, 1
      %s211 = scalar_select %p210, %s16, 1
      %s212 = smul.addr %s211, 32
      %s213 = smul.addr %s212, 8
      %s214 = scalar_lea.vmem %s5, %s213
      %p215 = scmp.lt.s32.totalorder %s16, 1
      %s216 = scalar_select %p215, %s16, 1
      %s217 = smul.addr %s216, 54
      %s218 = smul.addr %s217, 8
      %s219 = scalar_lea.vmem %s0, %s218
      %p220 = scmp.lt.s32.totalorder %s16, 1
      %s221 = scalar_select %p220, %s16, 1
      %s222 = smul.addr %s221, 32
      %s223 = smul.addr %s222, 8
      %s224 = scalar_lea.vmem %s5, %s223
      %v225 = vld [vmem:[%s219] sm:$0xff]
      %v226 = vld [vmem:[%s219 + $0x8] sm:$0xff]
      %v227 = vld [vmem:[%s219 + $0x10] sm:$0x3]
      %v228 = vld [vmem:[%s219 + $0x18] sm:$0xff]
      %v229 = vld [vmem:[%s219 + $0x20] sm:$0xff]
      %v230 = vld [vmem:[%s219 + $0x28] sm:$0x3]
      %v231 = vld [vmem:[%s219 + $0x30] sm:$0xff]
      %v232 = vld [vmem:[%s219 + $0x38] sm:$0xff]
      %v233 = vld [vmem:[%s219 + $0x40] sm:$0x3]
      %v234 = vld [vmem:[%s219 + $0x48] sm:$0xff]
      %v235 = vld [vmem:[%s219 + $0x50] sm:$0xff]
      %v236 = vld [vmem:[%s219 + $0x58] sm:$0x3]
      %v237 = vld [vmem:[%s219 + $0x60] sm:$0xff]
      %v238 = vld [vmem:[%s219 + $0x68] sm:$0xff]
      %v239 = vld [vmem:[%s219 + $0x70] sm:$0x3]
      %v240 = vld [vmem:[%s219 + $0x78] sm:$0xff]
      %v241 = vld [vmem:[%s219 + $0x80] sm:$0xff]
      %v242 = vld [vmem:[%s219 + $0x88] sm:$0x3]
      %v243 = vld [vmem:[%s219 + $0x90] sm:$0xff]
      %v244 = vld [vmem:[%s219 + $0x98] sm:$0xff]
      %v245 = vld [vmem:[%s219 + $0xa0] sm:$0x3]
      %v246 = vld [vmem:[%s219 + $0xa8] sm:$0xff]
      %v247 = vld [vmem:[%s219 + $0xb0] sm:$0xff]
      %v248 = vld [vmem:[%s219 + $0xb8] sm:$0x3]
      %v249 = vld [vmem:[%s219 + $0xc0] sm:$0xff]
      %v250 = vld [vmem:[%s219 + $0xc8] sm:$0xff]
      %v251 = vld [vmem:[%s219 + $0xd0] sm:$0x3]
      %v252 = vld [vmem:[%s219 + $0xd8] sm:$0xff]
      %v253 = vld [vmem:[%s219 + $0xe0] sm:$0xff]
      %v254 = vld [vmem:[%s219 + $0xe8] sm:$0x3]
      %v255 = vld [vmem:[%s219 + $0xf0] sm:$0xff]
      %v256 = vld [vmem:[%s219 + $0xf8] sm:$0xff]
      %v257 = vld [vmem:[%s219 + $0x100] sm:$0x3]
      %v258 = vld [vmem:[%s219 + $0x108] sm:$0xff]
      %v259 = vld [vmem:[%s219 + $0x110] sm:$0xff]
      %v260 = vld [vmem:[%s219 + $0x118] sm:$0x3]
      %v261 = vld [vmem:[%s219 + $0x120] sm:$0xff]
      %v262 = vld [vmem:[%s219 + $0x128] sm:$0xff]
      %v263 = vld [vmem:[%s219 + $0x130] sm:$0x3]
      %v264 = vld [vmem:[%s219 + $0x138] sm:$0xff]
      %v265 = vld [vmem:[%s219 + $0x140] sm:$0xff]
      %v266 = vld [vmem:[%s219 + $0x148] sm:$0x3]
      %v267 = vld [vmem:[%s219 + $0x150] sm:$0xff]
      %v268 = vld [vmem:[%s219 + $0x158] sm:$0xff]
      %v269 = vld [vmem:[%s219 + $0x160] sm:$0x3]
      %v270 = vld [vmem:[%s219 + $0x168] sm:$0xff]
      %v271 = vld [vmem:[%s219 + $0x170] sm:$0xff]
      %v272 = vld [vmem:[%s219 + $0x178] sm:$0x3]
      %v273 = vld [vmem:[%s219 + $0x180] sm:$0xff]
      %v274 = vld [vmem:[%s219 + $0x188] sm:$0xff]
      %v275 = vld [vmem:[%s219 + $0x190] sm:$0x3]
      %v276 = vld [vmem:[%s219 + $0x198] sm:$0xff]
      %v277 = vld [vmem:[%s219 + $0x1a0] sm:$0xff]
      %v278 = vld [vmem:[%s219 + $0x1a8] sm:$0x3]
      %vm327 = vcmask 1046528
      %v328 = vrot.slane %v225, 1
      %v329 = vrot.slane %v226, 1
      %v330 = vsel %vm327, %v328, %v329
      %v331 = vrot.slane %v227, 1
      %v332 = vsel %vm327, %v329, %v331
      %v333 = vrot.slane %v228, 1
      %v334 = vrot.slane %v229, 1
      %v335 = vsel %vm327, %v333, %v334
      %v336 = vrot.slane %v230, 1
      %v337 = vsel %vm327, %v334, %v336
      %v338 = vrot.slane %v231, 1
      %v339 = vrot.slane %v232, 1
      %v340 = vsel %vm327, %v338, %v339
      %v341 = vrot.slane %v233, 1
      %v342 = vsel %vm327, %v339, %v341
      %v343 = vrot.slane %v234, 1
      %v344 = vrot.slane %v235, 1
      %v345 = vsel %vm327, %v343, %v344
      %v346 = vrot.slane %v236, 1
      %v347 = vsel %vm327, %v344, %v346
      %v348 = vrot.slane %v237, 1
      %v349 = vrot.slane %v238, 1
      %v350 = vsel %vm327, %v348, %v349
      %v351 = vrot.slane %v239, 1
      %v352 = vsel %vm327, %v349, %v351
      %v353 = vrot.slane %v240, 1
      %v354 = vrot.slane %v241, 1
      %v355 = vsel %vm327, %v353, %v354
      %v356 = vrot.slane %v242, 1
      %v357 = vsel %vm327, %v354, %v356
      %v358 = vrot.slane %v243, 1
      %v359 = vrot.slane %v244, 1
      %v360 = vsel %vm327, %v358, %v359
      %v361 = vrot.slane %v245, 1
      %v362 = vsel %vm327, %v359, %v361
      %v363 = vrot.slane %v246, 1
      %v364 = vrot.slane %v247, 1
      %v365 = vsel %vm327, %v363, %v364
      %v366 = vrot.slane %v248, 1
      %v367 = vsel %vm327, %v364, %v366
      %v368 = vrot.slane %v249, 1
      %v369 = vrot.slane %v250, 1
      %v370 = vsel %vm327, %v368, %v369
      %v371 = vrot.slane %v251, 1
      %v372 = vsel %vm327, %v369, %v371
      %v373 = vrot.slane %v252, 1
      %v374 = vrot.slane %v253, 1
      %v375 = vsel %vm327, %v373, %v374
      %v376 = vrot.slane %v254, 1
      %v377 = vsel %vm327, %v374, %v376
      %v378 = vrot.slane %v255, 1
      %v379 = vrot.slane %v256, 1
      %v380 = vsel %vm327, %v378, %v379
      %v381 = vrot.slane %v257, 1
      %v382 = vsel %vm327, %v379, %v381
      %v383 = vrot.slane %v258, 1
      %v384 = vrot.slane %v259, 1
      %v385 = vsel %vm327, %v383, %v384
      %v386 = vrot.slane %v260, 1
      %v387 = vsel %vm327, %v384, %v386
      %v388 = vrot.slane %v261, 1
      %v389 = vrot.slane %v262, 1
      %v390 = vsel %vm327, %v388, %v389
      %v391 = vrot.slane %v263, 1
      %v392 = vsel %vm327, %v389, %v391
      %v393 = vrot.slane %v264, 1
      %v394 = vrot.slane %v265, 1
      %v395 = vsel %vm327, %v393, %v394
      %v396 = vrot.slane %v266, 1
      %v397 = vsel %vm327, %v394, %v396
      %v398 = vrot.slane %v267, 1
      %v399 = vrot.slane %v268, 1
      %v400 = vsel %vm327, %v398, %v399
      %v401 = vrot.slane %v269, 1
      %v402 = vsel %vm327, %v399, %v401
      %v403 = vrot.slane %v270, 1
      %v404 = vrot.slane %v271, 1
      %v405 = vsel %vm327, %v403, %v404
      %v406 = vrot.slane %v272, 1
      %v407 = vsel %vm327, %v404, %v406
      %vm408 = vcmask 1045504
      %v409 = vrot.slane %v225, 2
      %v410 = vrot.slane %v226, 2
      %v411 = vsel %vm408, %v409, %v410
      %v412 = vrot.slane %v227, 2
      %v413 = vsel %vm408, %v410, %v412
      %v414 = vrot.slane %v228, 2
      %v415 = vrot.slane %v229, 2
      %v416 = vsel %vm408, %v414, %v415
      %v417 = vrot.slane %v230, 2
      %v418 = vsel %vm408, %v415, %v417
      %v419 = vrot.slane %v231, 2
      %v420 = vrot.slane %v232, 2
      %v421 = vsel %vm408, %v419, %v420
      %v422 = vrot.slane %v233, 2
      %v423 = vsel %vm408, %v420, %v422
      %v424 = vrot.slane %v234, 2
      %v425 = vrot.slane %v235, 2
      %v426 = vsel %vm408, %v424, %v425
      %v427 = vrot.slane %v236, 2
      %v428 = vsel %vm408, %v425, %v427
      %v429 = vrot.slane %v237, 2
      %v430 = vrot.slane %v238, 2
      %v431 = vsel %vm408, %v429, %v430
      %v432 = vrot.slane %v239, 2
      %v433 = vsel %vm408, %v430, %v432
      %v434 = vrot.slane %v240, 2
      %v435 = vrot.slane %v241, 2
      %v436 = vsel %vm408, %v434, %v435
      %v437 = vrot.slane %v242, 2
      %v438 = vsel %vm408, %v435, %v437
      %v439 = vrot.slane %v243, 2
      %v440 = vrot.slane %v244, 2
      %v441 = vsel %vm408, %v439, %v440
      %v442 = vrot.slane %v245, 2
      %v443 = vsel %vm408, %v440, %v442
      %v444 = vrot.slane %v246, 2
      %v445 = vrot.slane %v247, 2
      %v446 = vsel %vm408, %v444, %v445
      %v447 = vrot.slane %v248, 2
      %v448 = vsel %vm408, %v445, %v447
      %v449 = vrot.slane %v249, 2
      %v450 = vrot.slane %v250, 2
      %v451 = vsel %vm408, %v449, %v450
      %v452 = vrot.slane %v251, 2
      %v453 = vsel %vm408, %v450, %v452
      %v454 = vrot.slane %v252, 2
      %v455 = vrot.slane %v253, 2
      %v456 = vsel %vm408, %v454, %v455
      %v457 = vrot.slane %v254, 2
      %v458 = vsel %vm408, %v455, %v457
      %v459 = vrot.slane %v255, 2
      %v460 = vrot.slane %v256, 2
      %v461 = vsel %vm408, %v459, %v460
      %v462 = vrot.slane %v257, 2
      %v463 = vsel %vm408, %v460, %v462
      %v464 = vrot.slane %v258, 2
      %v465 = vrot.slane %v259, 2
      %v466 = vsel %vm408, %v464, %v465
      %v467 = vrot.slane %v260, 2
      %v468 = vsel %vm408, %v465, %v467
      %v469 = vrot.slane %v261, 2
      %v470 = vrot.slane %v262, 2
      %v471 = vsel %vm408, %v469, %v470
      %v472 = vrot.slane %v263, 2
      %v473 = vsel %vm408, %v470, %v472
      %v474 = vrot.slane %v264, 2
      %v475 = vrot.slane %v265, 2
      %v476 = vsel %vm408, %v474, %v475
      %v477 = vrot.slane %v266, 2
      %v478 = vsel %vm408, %v475, %v477
      %v479 = vrot.slane %v267, 2
      %v480 = vrot.slane %v268, 2
      %v481 = vsel %vm408, %v479, %v480
      %v482 = vrot.slane %v269, 2
      %v483 = vsel %vm408, %v480, %v482
      %v484 = vrot.slane %v270, 2
      %v485 = vrot.slane %v271, 2
      %v486 = vsel %vm408, %v484, %v485
      %v487 = vrot.slane %v272, 2
      %v488 = vsel %vm408, %v485, %v487
      %v492 = vrot.slane %v273, 1
      %v493 = vrot.slane %v274, 1
      %v494 = vsel %vm327, %v492, %v493
      %v495 = vrot.slane %v275, 1
      %v496 = vsel %vm327, %v493, %v495
      %v497 = vrot.slane %v273, 2
      %v498 = vrot.slane %v274, 2
      %v499 = vsel %vm408, %v497, %v498
      %v500 = vrot.slane %v275, 2
      %v501 = vsel %vm408, %v498, %v500
      %v505 = vrot.slane %v276, 1
      %v506 = vrot.slane %v277, 1
      %v507 = vsel %vm327, %v505, %v506
      %v508 = vrot.slane %v278, 1
      %v509 = vsel %vm327, %v506, %v508
      %v510 = vrot.slane %v276, 2
      %v511 = vrot.slane %v277, 2
      %v512 = vsel %vm408, %v510, %v511
      %v513 = vrot.slane %v278, 2
      %v514 = vsel %vm408, %v511, %v513
      %515 = vrot.lane.b32.xlu0 %v330, 4
      %v516 = vpop.permute.xlu0 %515
      %517 = vrot.lane.b32.xlu0 %v332, 4
      %v518 = vpop.permute.xlu0 %517
      %519 = vrot.lane.b32.xlu0 %v335, 4
      %v520 = vpop.permute.xlu0 %519
      %521 = vrot.lane.b32.xlu0 %v337, 4
      %v522 = vpop.permute.xlu0 %521
      %523 = vrot.lane.b32.xlu0 %v340, 4
      %v524 = vpop.permute.xlu0 %523
      %525 = vrot.lane.b32.xlu0 %v342, 4
      %v526 = vpop.permute.xlu0 %525
      %527 = vrot.lane.b32.xlu0 %v345, 4
      %v528 = vpop.permute.xlu0 %527
      %529 = vrot.lane.b32.xlu0 %v347, 4
      %v530 = vpop.permute.xlu0 %529
      %531 = vrot.lane.b32.xlu0 %v350, 4
      %v532 = vpop.permute.xlu0 %531
      %533 = vrot.lane.b32.xlu0 %v352, 4
      %v534 = vpop.permute.xlu0 %533
      %535 = vrot.lane.b32.xlu0 %v355, 4
      %v536 = vpop.permute.xlu0 %535
      %537 = vrot.lane.b32.xlu0 %v357, 4
      %v538 = vpop.permute.xlu0 %537
      %539 = vrot.lane.b32.xlu0 %v360, 4
      %v540 = vpop.permute.xlu0 %539
      %541 = vrot.lane.b32.xlu0 %v362, 4
      %v542 = vpop.permute.xlu0 %541
      %543 = vrot.lane.b32.xlu0 %v365, 4
      %v544 = vpop.permute.xlu0 %543
      %545 = vrot.lane.b32.xlu0 %v367, 4
      %v546 = vpop.permute.xlu0 %545
      %547 = vrot.lane.b32.xlu0 %v370, 4
      %v548 = vpop.permute.xlu0 %547
      %549 = vrot.lane.b32.xlu0 %v372, 4
      %v550 = vpop.permute.xlu0 %549
      %551 = vrot.lane.b32.xlu0 %v375, 4
      %v552 = vpop.permute.xlu0 %551
      %553 = vrot.lane.b32.xlu0 %v377, 4
      %v554 = vpop.permute.xlu0 %553
      %555 = vrot.lane.b32.xlu0 %v380, 4
      %v556 = vpop.permute.xlu0 %555
      %557 = vrot.lane.b32.xlu0 %v382, 4
      %v558 = vpop.permute.xlu0 %557
      %559 = vrot.lane.b32.xlu0 %v385, 4
      %v560 = vpop.permute.xlu0 %559
      %561 = vrot.lane.b32.xlu0 %v387, 4
      %v562 = vpop.permute.xlu0 %561
      %563 = vrot.lane.b32.xlu0 %v390, 4
      %v564 = vpop.permute.xlu0 %563
      %565 = vrot.lane.b32.xlu0 %v392, 4
      %v566 = vpop.permute.xlu0 %565
      %567 = vrot.lane.b32.xlu0 %v395, 4
      %v568 = vpop.permute.xlu0 %567
      %569 = vrot.lane.b32.xlu0 %v397, 4
      %v570 = vpop.permute.xlu0 %569
      %571 = vrot.lane.b32.xlu0 %v400, 4
      %v572 = vpop.permute.xlu0 %571
      %573 = vrot.lane.b32.xlu0 %v402, 4
      %v574 = vpop.permute.xlu0 %573
      %575 = vrot.lane.b32.xlu0 %v405, 4
      %v576 = vpop.permute.xlu0 %575
      %577 = vrot.lane.b32.xlu0 %v407, 4
      %v578 = vpop.permute.xlu0 %577
      %611 = vrot.lane.b32.xlu0 %v411, 8
      %v612 = vpop.permute.xlu0 %611
      %613 = vrot.lane.b32.xlu0 %v413, 8
      %v614 = vpop.permute.xlu0 %613
      %615 = vrot.lane.b32.xlu0 %v416, 8
      %v616 = vpop.permute.xlu0 %615
      %617 = vrot.lane.b32.xlu0 %v418, 8
      %v618 = vpop.permute.xlu0 %617
      %619 = vrot.lane.b32.xlu0 %v421, 8
      %v620 = vpop.permute.xlu0 %619
      %621 = vrot.lane.b32.xlu0 %v423, 8
      %v622 = vpop.permute.xlu0 %621
      %623 = vrot.lane.b32.xlu0 %v426, 8
      %v624 = vpop.permute.xlu0 %623
      %625 = vrot.lane.b32.xlu0 %v428, 8
      %v626 = vpop.permute.xlu0 %625
      %627 = vrot.lane.b32.xlu0 %v431, 8
      %v628 = vpop.permute.xlu0 %627
      %629 = vrot.lane.b32.xlu0 %v433, 8
      %v630 = vpop.permute.xlu0 %629
      %631 = vrot.lane.b32.xlu0 %v436, 8
      %v632 = vpop.permute.xlu0 %631
      %633 = vrot.lane.b32.xlu0 %v438, 8
      %v634 = vpop.permute.xlu0 %633
      %635 = vrot.lane.b32.xlu0 %v441, 8
      %v636 = vpop.permute.xlu0 %635
      %637 = vrot.lane.b32.xlu0 %v443, 8
      %v638 = vpop.permute.xlu0 %637
      %639 = vrot.lane.b32.xlu0 %v446, 8
      %v640 = vpop.permute.xlu0 %639
      %641 = vrot.lane.b32.xlu0 %v448, 8
      %v642 = vpop.permute.xlu0 %641
      %643 = vrot.lane.b32.xlu0 %v451, 8
      %v644 = vpop.permute.xlu0 %643
      %645 = vrot.lane.b32.xlu0 %v453, 8
      %v646 = vpop.permute.xlu0 %645
      %647 = vrot.lane.b32.xlu0 %v456, 8
      %v648 = vpop.permute.xlu0 %647
      %649 = vrot.lane.b32.xlu0 %v458, 8
      %v650 = vpop.permute.xlu0 %649
      %651 = vrot.lane.b32.xlu0 %v461, 8
      %v652 = vpop.permute.xlu0 %651
      %653 = vrot.lane.b32.xlu0 %v463, 8
      %v654 = vpop.permute.xlu0 %653
      %655 = vrot.lane.b32.xlu0 %v466, 8
      %v656 = vpop.permute.xlu0 %655
      %657 = vrot.lane.b32.xlu0 %v468, 8
      %v658 = vpop.permute.xlu0 %657
      %659 = vrot.lane.b32.xlu0 %v471, 8
      %v660 = vpop.permute.xlu0 %659
      %661 = vrot.lane.b32.xlu0 %v473, 8
      %v662 = vpop.permute.xlu0 %661
      %663 = vrot.lane.b32.xlu0 %v476, 8
      %v664 = vpop.permute.xlu0 %663
      %665 = vrot.lane.b32.xlu0 %v478, 8
      %v666 = vpop.permute.xlu0 %665
      %667 = vrot.lane.b32.xlu0 %v481, 8
      %v668 = vpop.permute.xlu0 %667
      %669 = vrot.lane.b32.xlu0 %v483, 8
      %v670 = vpop.permute.xlu0 %669
      %671 = vrot.lane.b32.xlu0 %v486, 8
      %v672 = vpop.permute.xlu0 %671
      %673 = vrot.lane.b32.xlu0 %v488, 8
      %v674 = vpop.permute.xlu0 %673
      %707 = vrot.lane.b32.xlu0 %v228, 12
      %v708 = vpop.permute.xlu0 %707
      %709 = vrot.lane.b32.xlu0 %v229, 12
      %v710 = vpop.permute.xlu0 %709
      %711 = vrot.lane.b32.xlu0 %v231, 12
      %v712 = vpop.permute.xlu0 %711
      %713 = vrot.lane.b32.xlu0 %v232, 12
      %v714 = vpop.permute.xlu0 %713
      %715 = vrot.lane.b32.xlu0 %v234, 12
      %v716 = vpop.permute.xlu0 %715
      %717 = vrot.lane.b32.xlu0 %v235, 12
      %v718 = vpop.permute.xlu0 %717
      %719 = vrot.lane.b32.xlu0 %v237, 12
      %v720 = vpop.permute.xlu0 %719
      %721 = vrot.lane.b32.xlu0 %v238, 12
      %v722 = vpop.permute.xlu0 %721
      %723 = vrot.lane.b32.xlu0 %v240, 12
      %v724 = vpop.permute.xlu0 %723
      %725 = vrot.lane.b32.xlu0 %v241, 12
      %v726 = vpop.permute.xlu0 %725
      %727 = vrot.lane.b32.xlu0 %v243, 12
      %v728 = vpop.permute.xlu0 %727
      %729 = vrot.lane.b32.xlu0 %v244, 12
      %v730 = vpop.permute.xlu0 %729
      %731 = vrot.lane.b32.xlu0 %v246, 12
      %v732 = vpop.permute.xlu0 %731
      %733 = vrot.lane.b32.xlu0 %v247, 12
      %v734 = vpop.permute.xlu0 %733
      %735 = vrot.lane.b32.xlu0 %v249, 12
      %v736 = vpop.permute.xlu0 %735
      %737 = vrot.lane.b32.xlu0 %v250, 12
      %v738 = vpop.permute.xlu0 %737
      %739 = vrot.lane.b32.xlu0 %v252, 12
      %v740 = vpop.permute.xlu0 %739
      %741 = vrot.lane.b32.xlu0 %v253, 12
      %v742 = vpop.permute.xlu0 %741
      %743 = vrot.lane.b32.xlu0 %v255, 12
      %v744 = vpop.permute.xlu0 %743
      %745 = vrot.lane.b32.xlu0 %v256, 12
      %v746 = vpop.permute.xlu0 %745
      %747 = vrot.lane.b32.xlu0 %v258, 12
      %v748 = vpop.permute.xlu0 %747
      %749 = vrot.lane.b32.xlu0 %v259, 12
      %v750 = vpop.permute.xlu0 %749
      %751 = vrot.lane.b32.xlu0 %v261, 12
      %v752 = vpop.permute.xlu0 %751
      %753 = vrot.lane.b32.xlu0 %v262, 12
      %v754 = vpop.permute.xlu0 %753
      %755 = vrot.lane.b32.xlu0 %v264, 12
      %v756 = vpop.permute.xlu0 %755
      %757 = vrot.lane.b32.xlu0 %v265, 12
      %v758 = vpop.permute.xlu0 %757
      %759 = vrot.lane.b32.xlu0 %v267, 12
      %v760 = vpop.permute.xlu0 %759
      %761 = vrot.lane.b32.xlu0 %v268, 12
      %v762 = vpop.permute.xlu0 %761
      %763 = vrot.lane.b32.xlu0 %v270, 12
      %v764 = vpop.permute.xlu0 %763
      %765 = vrot.lane.b32.xlu0 %v271, 12
      %v766 = vpop.permute.xlu0 %765
      %767 = vrot.lane.b32.xlu0 %v273, 12
      %v768 = vpop.permute.xlu0 %767
      %769 = vrot.lane.b32.xlu0 %v274, 12
      %v770 = vpop.permute.xlu0 %769
      %803 = vrot.lane.b32.xlu0 %v335, 16
      %v804 = vpop.permute.xlu0 %803
      %805 = vrot.lane.b32.xlu0 %v337, 16
      %v806 = vpop.permute.xlu0 %805
      %807 = vrot.lane.b32.xlu0 %v340, 16
      %v808 = vpop.permute.xlu0 %807
      %809 = vrot.lane.b32.xlu0 %v342, 16
      %v810 = vpop.permute.xlu0 %809
      %811 = vrot.lane.b32.xlu0 %v345, 16
      %v812 = vpop.permute.xlu0 %811
      %813 = vrot.lane.b32.xlu0 %v347, 16
      %v814 = vpop.permute.xlu0 %813
      %815 = vrot.lane.b32.xlu0 %v350, 16
      %v816 = vpop.permute.xlu0 %815
      %817 = vrot.lane.b32.xlu0 %v352, 16
      %v818 = vpop.permute.xlu0 %817
      %819 = vrot.lane.b32.xlu0 %v355, 16
      %v820 = vpop.permute.xlu0 %819
      %821 = vrot.lane.b32.xlu0 %v357, 16
      %v822 = vpop.permute.xlu0 %821
      %823 = vrot.lane.b32.xlu0 %v360, 16
      %v824 = vpop.permute.xlu0 %823
      %825 = vrot.lane.b32.xlu0 %v362, 16
      %v826 = vpop.permute.xlu0 %825
      %827 = vrot.lane.b32.xlu0 %v365, 16
      %v828 = vpop.permute.xlu0 %827
      %829 = vrot.lane.b32.xlu0 %v367, 16
      %v830 = vpop.permute.xlu0 %829
      %831 = vrot.lane.b32.xlu0 %v370, 16
      %v832 = vpop.permute.xlu0 %831
      %833 = vrot.lane.b32.xlu0 %v372, 16
      %v834 = vpop.permute.xlu0 %833
      %835 = vrot.lane.b32.xlu0 %v375, 16
      %v836 = vpop.permute.xlu0 %835
      %837 = vrot.lane.b32.xlu0 %v377, 16
      %v838 = vpop.permute.xlu0 %837
      %839 = vrot.lane.b32.xlu0 %v380, 16
      %v840 = vpop.permute.xlu0 %839
      %841 = vrot.lane.b32.xlu0 %v382, 16
      %v842 = vpop.permute.xlu0 %841
      %843 = vrot.lane.b32.xlu0 %v385, 16
      %v844 = vpop.permute.xlu0 %843
      %845 = vrot.lane.b32.xlu0 %v387, 16
      %v846 = vpop.permute.xlu0 %845
      %847 = vrot.lane.b32.xlu0 %v390, 16
      %v848 = vpop.permute.xlu0 %847
      %849 = vrot.lane.b32.xlu0 %v392, 16
      %v850 = vpop.permute.xlu0 %849
      %851 = vrot.lane.b32.xlu0 %v395, 16
      %v852 = vpop.permute.xlu0 %851
      %853 = vrot.lane.b32.xlu0 %v397, 16
      %v854 = vpop.permute.xlu0 %853
      %855 = vrot.lane.b32.xlu0 %v400, 16
      %v856 = vpop.permute.xlu0 %855
      %857 = vrot.lane.b32.xlu0 %v402, 16
      %v858 = vpop.permute.xlu0 %857
      %859 = vrot.lane.b32.xlu0 %v405, 16
      %v860 = vpop.permute.xlu0 %859
      %861 = vrot.lane.b32.xlu0 %v407, 16
      %v862 = vpop.permute.xlu0 %861
      %863 = vrot.lane.b32.xlu0 %v494, 16
      %v864 = vpop.permute.xlu0 %863
      %865 = vrot.lane.b32.xlu0 %v496, 16
      %v866 = vpop.permute.xlu0 %865
      %899 = vrot.lane.b32.xlu0 %v416, 20
      %v900 = vpop.permute.xlu0 %899
      %901 = vrot.lane.b32.xlu0 %v418, 20
      %v902 = vpop.permute.xlu0 %901
      %903 = vrot.lane.b32.xlu0 %v421, 20
      %v904 = vpop.permute.xlu0 %903
      %905 = vrot.lane.b32.xlu0 %v423, 20
      %v906 = vpop.permute.xlu0 %905
      %907 = vrot.lane.b32.xlu0 %v426, 20
      %v908 = vpop.permute.xlu0 %907
      %909 = vrot.lane.b32.xlu0 %v428, 20
      %v910 = vpop.permute.xlu0 %909
      %911 = vrot.lane.b32.xlu0 %v431, 20
      %v912 = vpop.permute.xlu0 %911
      %913 = vrot.lane.b32.xlu0 %v433, 20
      %v914 = vpop.permute.xlu0 %913
      %915 = vrot.lane.b32.xlu0 %v436, 20
      %v916 = vpop.permute.xlu0 %915
      %917 = vrot.lane.b32.xlu0 %v438, 20
      %v918 = vpop.permute.xlu0 %917
      %919 = vrot.lane.b32.xlu0 %v441, 20
      %v920 = vpop.permute.xlu0 %919
      %921 = vrot.lane.b32.xlu0 %v443, 20
      %v922 = vpop.permute.xlu0 %921
      %923 = vrot.lane.b32.xlu0 %v446, 20
      %v924 = vpop.permute.xlu0 %923
      %925 = vrot.lane.b32.xlu0 %v448, 20
      %v926 = vpop.permute.xlu0 %925
      %927 = vrot.lane.b32.xlu0 %v451, 20
      %v928 = vpop.permute.xlu0 %927
      %929 = vrot.lane.b32.xlu0 %v453, 20
      %v930 = vpop.permute.xlu0 %929
      %931 = vrot.lane.b32.xlu0 %v456, 20
      %v932 = vpop.permute.xlu0 %931
      %933 = vrot.lane.b32.xlu0 %v458, 20
      %v934 = vpop.permute.xlu0 %933
      %935 = vrot.lane.b32.xlu0 %v461, 20
      %v936 = vpop.permute.xlu0 %935
      %937 = vrot.lane.b32.xlu0 %v463, 20
      %v938 = vpop.permute.xlu0 %937
      %939 = vrot.lane.b32.xlu0 %v466, 20
      %v940 = vpop.permute.xlu0 %939
      %941 = vrot.lane.b32.xlu0 %v468, 20
      %v942 = vpop.permute.xlu0 %941
      %943 = vrot.lane.b32.xlu0 %v471, 20
      %v944 = vpop.permute.xlu0 %943
      %945 = vrot.lane.b32.xlu0 %v473, 20
      %v946 = vpop.permute.xlu0 %945
      %947 = vrot.lane.b32.xlu0 %v476, 20
      %v948 = vpop.permute.xlu0 %947
      %949 = vrot.lane.b32.xlu0 %v478, 20
      %v950 = vpop.permute.xlu0 %949
      %951 = vrot.lane.b32.xlu0 %v481, 20
      %v952 = vpop.permute.xlu0 %951
      %953 = vrot.lane.b32.xlu0 %v483, 20
      %v954 = vpop.permute.xlu0 %953
      %955 = vrot.lane.b32.xlu0 %v486, 20
      %v956 = vpop.permute.xlu0 %955
      %957 = vrot.lane.b32.xlu0 %v488, 20
      %v958 = vpop.permute.xlu0 %957
      %959 = vrot.lane.b32.xlu0 %v499, 20
      %v960 = vpop.permute.xlu0 %959
      %961 = vrot.lane.b32.xlu0 %v501, 20
      %v962 = vpop.permute.xlu0 %961
      %995 = vrot.lane.b32.xlu0 %v231, 24
      %v996 = vpop.permute.xlu0 %995
      %997 = vrot.lane.b32.xlu0 %v232, 24
      %v998 = vpop.permute.xlu0 %997
      %999 = vrot.lane.b32.xlu0 %v234, 24
      %v1000 = vpop.permute.xlu0 %999
      %1001 = vrot.lane.b32.xlu0 %v235, 24
      %v1002 = vpop.permute.xlu0 %1001
      %1003 = vrot.lane.b32.xlu0 %v237, 24
      %v1004 = vpop.permute.xlu0 %1003
      %1005 = vrot.lane.b32.xlu0 %v238, 24
      %v1006 = vpop.permute.xlu0 %1005
      %1007 = vrot.lane.b32.xlu0 %v240, 24
      %v1008 = vpop.permute.xlu0 %1007
      %1009 = vrot.lane.b32.xlu0 %v241, 24
      %v1010 = vpop.permute.xlu0 %1009
      %1011 = vrot.lane.b32.xlu0 %v243, 24
      %v1012 = vpop.permute.xlu0 %1011
      %1013 = vrot.lane.b32.xlu0 %v244, 24
      %v1014 = vpop.permute.xlu0 %1013
      %1015 = vrot.lane.b32.xlu0 %v246, 24
      %v1016 = vpop.permute.xlu0 %1015
      %1017 = vrot.lane.b32.xlu0 %v247, 24
      %v1018 = vpop.permute.xlu0 %1017
      %1019 = vrot.lane.b32.xlu0 %v249, 24
      %v1020 = vpop.permute.xlu0 %1019
      %1021 = vrot.lane.b32.xlu0 %v250, 24
      %v1022 = vpop.permute.xlu0 %1021
      %1023 = vrot.lane.b32.xlu0 %v252, 24
      %v1024 = vpop.permute.xlu0 %1023
      %1025 = vrot.lane.b32.xlu0 %v253, 24
      %v1026 = vpop.permute.xlu0 %1025
      %1027 = vrot.lane.b32.xlu0 %v255, 24
      %v1028 = vpop.permute.xlu0 %1027
      %1029 = vrot.lane.b32.xlu0 %v256, 24
      %v1030 = vpop.permute.xlu0 %1029
      %1031 = vrot.lane.b32.xlu0 %v258, 24
      %v1032 = vpop.permute.xlu0 %1031
      %1033 = vrot.lane.b32.xlu0 %v259, 24
      %v1034 = vpop.permute.xlu0 %1033
      %1035 = vrot.lane.b32.xlu0 %v261, 24
      %v1036 = vpop.permute.xlu0 %1035
      %1037 = vrot.lane.b32.xlu0 %v262, 24
      %v1038 = vpop.permute.xlu0 %1037
      %1039 = vrot.lane.b32.xlu0 %v264, 24
      %v1040 = vpop.permute.xlu0 %1039
      %1041 = vrot.lane.b32.xlu0 %v265, 24
      %v1042 = vpop.permute.xlu0 %1041
      %1043 = vrot.lane.b32.xlu0 %v267, 24
      %v1044 = vpop.permute.xlu0 %1043
      %1045 = vrot.lane.b32.xlu0 %v268, 24
      %v1046 = vpop.permute.xlu0 %1045
      %1047 = vrot.lane.b32.xlu0 %v270, 24
      %v1048 = vpop.permute.xlu0 %1047
      %1049 = vrot.lane.b32.xlu0 %v271, 24
      %v1050 = vpop.permute.xlu0 %1049
      %1051 = vrot.lane.b32.xlu0 %v273, 24
      %v1052 = vpop.permute.xlu0 %1051
      %1053 = vrot.lane.b32.xlu0 %v274, 24
      %v1054 = vpop.permute.xlu0 %1053
      %1055 = vrot.lane.b32.xlu0 %v276, 24
      %v1056 = vpop.permute.xlu0 %1055
      %1057 = vrot.lane.b32.xlu0 %v277, 24
      %v1058 = vpop.permute.xlu0 %1057
      %1091 = vrot.lane.b32.xlu0 %v340, 28
      %v1092 = vpop.permute.xlu0 %1091
      %1093 = vrot.lane.b32.xlu0 %v342, 28
      %v1094 = vpop.permute.xlu0 %1093
      %1095 = vrot.lane.b32.xlu0 %v345, 28
      %v1096 = vpop.permute.xlu0 %1095
      %1097 = vrot.lane.b32.xlu0 %v347, 28
      %v1098 = vpop.permute.xlu0 %1097
      %1099 = vrot.lane.b32.xlu0 %v350, 28
      %v1100 = vpop.permute.xlu0 %1099
      %1101 = vrot.lane.b32.xlu0 %v352, 28
      %v1102 = vpop.permute.xlu0 %1101
      %1103 = vrot.lane.b32.xlu0 %v355, 28
      %v1104 = vpop.permute.xlu0 %1103
      %1105 = vrot.lane.b32.xlu0 %v357, 28
      %v1106 = vpop.permute.xlu0 %1105
      %1107 = vrot.lane.b32.xlu0 %v360, 28
      %v1108 = vpop.permute.xlu0 %1107
      %1109 = vrot.lane.b32.xlu0 %v362, 28
      %v1110 = vpop.permute.xlu0 %1109
      %1111 = vrot.lane.b32.xlu0 %v365, 28
      %v1112 = vpop.permute.xlu0 %1111
      %1113 = vrot.lane.b32.xlu0 %v367, 28
      %v1114 = vpop.permute.xlu0 %1113
      %1115 = vrot.lane.b32.xlu0 %v370, 28
      %v1116 = vpop.permute.xlu0 %1115
      %1117 = vrot.lane.b32.xlu0 %v372, 28
      %v1118 = vpop.permute.xlu0 %1117
      %1119 = vrot.lane.b32.xlu0 %v375, 28
      %v1120 = vpop.permute.xlu0 %1119
      %1121 = vrot.lane.b32.xlu0 %v377, 28
      %v1122 = vpop.permute.xlu0 %1121
      %1123 = vrot.lane.b32.xlu0 %v380, 28
      %v1124 = vpop.permute.xlu0 %1123
      %1125 = vrot.lane.b32.xlu0 %v382, 28
      %v1126 = vpop.permute.xlu0 %1125
      %1127 = vrot.lane.b32.xlu0 %v385, 28
      %v1128 = vpop.permute.xlu0 %1127
      %1129 = vrot.lane.b32.xlu0 %v387, 28
      %v1130 = vpop.permute.xlu0 %1129
      %1131 = vrot.lane.b32.xlu0 %v390, 28
      %v1132 = vpop.permute.xlu0 %1131
      %1133 = vrot.lane.b32.xlu0 %v392, 28
      %v1134 = vpop.permute.xlu0 %1133
      %1135 = vrot.lane.b32.xlu0 %v395, 28
      %v1136 = vpop.permute.xlu0 %1135
      %1137 = vrot.lane.b32.xlu0 %v397, 28
      %v1138 = vpop.permute.xlu0 %1137
      %1139 = vrot.lane.b32.xlu0 %v400, 28
      %v1140 = vpop.permute.xlu0 %1139
      %1141 = vrot.lane.b32.xlu0 %v402, 28
      %v1142 = vpop.permute.xlu0 %1141
      %1143 = vrot.lane.b32.xlu0 %v405, 28
      %v1144 = vpop.permute.xlu0 %1143
      %1145 = vrot.lane.b32.xlu0 %v407, 28
      %v1146 = vpop.permute.xlu0 %1145
      %1147 = vrot.lane.b32.xlu0 %v494, 28
      %v1148 = vpop.permute.xlu0 %1147
      %1149 = vrot.lane.b32.xlu0 %v496, 28
      %v1150 = vpop.permute.xlu0 %1149
      %1151 = vrot.lane.b32.xlu0 %v507, 28
      %v1152 = vpop.permute.xlu0 %1151
      %1153 = vrot.lane.b32.xlu0 %v509, 28
      %v1154 = vpop.permute.xlu0 %1153
      %1187 = vrot.lane.b32.xlu0 %v421, 32
      %v1188 = vpop.permute.xlu0 %1187
      %1189 = vrot.lane.b32.xlu0 %v423, 32
      %v1190 = vpop.permute.xlu0 %1189
      %1191 = vrot.lane.b32.xlu0 %v426, 32
      %v1192 = vpop.permute.xlu0 %1191
      %1193 = vrot.lane.b32.xlu0 %v428, 32
      %v1194 = vpop.permute.xlu0 %1193
      %1195 = vrot.lane.b32.xlu0 %v431, 32
      %v1196 = vpop.permute.xlu0 %1195
      %1197 = vrot.lane.b32.xlu0 %v433, 32
      %v1198 = vpop.permute.xlu0 %1197
      %1199 = vrot.lane.b32.xlu0 %v436, 32
      %v1200 = vpop.permute.xlu0 %1199
      %1201 = vrot.lane.b32.xlu0 %v438, 32
      %v1202 = vpop.permute.xlu0 %1201
      %1203 = vrot.lane.b32.xlu0 %v441, 32
      %v1204 = vpop.permute.xlu0 %1203
      %1205 = vrot.lane.b32.xlu0 %v443, 32
      %v1206 = vpop.permute.xlu0 %1205
      %1207 = vrot.lane.b32.xlu0 %v446, 32
      %v1208 = vpop.permute.xlu0 %1207
      %1209 = vrot.lane.b32.xlu0 %v448, 32
      %v1210 = vpop.permute.xlu0 %1209
      %1211 = vrot.lane.b32.xlu0 %v451, 32
      %v1212 = vpop.permute.xlu0 %1211
      %1213 = vrot.lane.b32.xlu0 %v453, 32
      %v1214 = vpop.permute.xlu0 %1213
      %1215 = vrot.lane.b32.xlu0 %v456, 32
      %v1216 = vpop.permute.xlu0 %1215
      %1217 = vrot.lane.b32.xlu0 %v458, 32
      %v1218 = vpop.permute.xlu0 %1217
      %1219 = vrot.lane.b32.xlu0 %v461, 32
      %v1220 = vpop.permute.xlu0 %1219
      %1221 = vrot.lane.b32.xlu0 %v463, 32
      %v1222 = vpop.permute.xlu0 %1221
      %1223 = vrot.lane.b32.xlu0 %v466, 32
      %v1224 = vpop.permute.xlu0 %1223
      %1225 = vrot.lane.b32.xlu0 %v468, 32
      %v1226 = vpop.permute.xlu0 %1225
      %1227 = vrot.lane.b32.xlu0 %v471, 32
      %v1228 = vpop.permute.xlu0 %1227
      %1229 = vrot.lane.b32.xlu0 %v473, 32
      %v1230 = vpop.permute.xlu0 %1229
      %1231 = vrot.lane.b32.xlu0 %v476, 32
      %v1232 = vpop.permute.xlu0 %1231
      %1233 = vrot.lane.b32.xlu0 %v478, 32
      %v1234 = vpop.permute.xlu0 %1233
      %1235 = vrot.lane.b32.xlu0 %v481, 32
      %v1236 = vpop.permute.xlu0 %1235
      %1237 = vrot.lane.b32.xlu0 %v483, 32
      %v1238 = vpop.permute.xlu0 %1237
      %1239 = vrot.lane.b32.xlu0 %v486, 32
      %v1240 = vpop.permute.xlu0 %1239
      %1241 = vrot.lane.b32.xlu0 %v488, 32
      %v1242 = vpop.permute.xlu0 %1241
      %1243 = vrot.lane.b32.xlu0 %v499, 32
      %v1244 = vpop.permute.xlu0 %1243
      %1245 = vrot.lane.b32.xlu0 %v501, 32
      %v1246 = vpop.permute.xlu0 %1245
      %1247 = vrot.lane.b32.xlu0 %v512, 32
      %v1248 = vpop.permute.xlu0 %1247
      %1249 = vrot.lane.b32.xlu0 %v514, 32
      %v1250 = vpop.permute.xlu0 %1249
      %vm1283 = vcmask 31744
      %v1284 = vsel %vm1283, %v225, %v516
      %v1285 = vsel %vm1283, %v226, %v518
      %v1286 = vsel %vm1283, %v228, %v520
      %v1287 = vsel %vm1283, %v229, %v522
      %v1288 = vsel %vm1283, %v231, %v524
      %v1289 = vsel %vm1283, %v232, %v526
      %v1290 = vsel %vm1283, %v234, %v528
      %v1291 = vsel %vm1283, %v235, %v530
      %v1292 = vsel %vm1283, %v237, %v532
      %v1293 = vsel %vm1283, %v238, %v534
      %v1294 = vsel %vm1283, %v240, %v536
      %v1295 = vsel %vm1283, %v241, %v538
      %v1296 = vsel %vm1283, %v243, %v540
      %v1297 = vsel %vm1283, %v244, %v542
      %v1298 = vsel %vm1283, %v246, %v544
      %v1299 = vsel %vm1283, %v247, %v546
      %v1300 = vsel %vm1283, %v249, %v548
      %v1301 = vsel %vm1283, %v250, %v550
      %v1302 = vsel %vm1283, %v252, %v552
      %v1303 = vsel %vm1283, %v253, %v554
      %v1304 = vsel %vm1283, %v255, %v556
      %v1305 = vsel %vm1283, %v256, %v558
      %v1306 = vsel %vm1283, %v258, %v560
      %v1307 = vsel %vm1283, %v259, %v562
      %v1308 = vsel %vm1283, %v261, %v564
      %v1309 = vsel %vm1283, %v262, %v566
      %v1310 = vsel %vm1283, %v264, %v568
      %v1311 = vsel %vm1283, %v265, %v570
      %v1312 = vsel %vm1283, %v267, %v572
      %v1313 = vsel %vm1283, %v268, %v574
      %v1314 = vsel %vm1283, %v270, %v576
      %v1315 = vsel %vm1283, %v271, %v578
      %vm1316 = vcmask 64512
      %v1317 = vsel %vm1316, %v1284, %v612
      %v1318 = vsel %vm1316, %v1285, %v614
      %v1319 = vsel %vm1316, %v1286, %v616
      %v1320 = vsel %vm1316, %v1287, %v618
      %v1321 = vsel %vm1316, %v1288, %v620
      %v1322 = vsel %vm1316, %v1289, %v622
      %v1323 = vsel %vm1316, %v1290, %v624
      %v1324 = vsel %vm1316, %v1291, %v626
      %v1325 = vsel %vm1316, %v1292, %v628
      %v1326 = vsel %vm1316, %v1293, %v630
      %v1327 = vsel %vm1316, %v1294, %v632
      %v1328 = vsel %vm1316, %v1295, %v634
      %v1329 = vsel %vm1316, %v1296, %v636
      %v1330 = vsel %vm1316, %v1297, %v638
      %v1331 = vsel %vm1316, %v1298, %v640
      %v1332 = vsel %vm1316, %v1299, %v642
      %v1333 = vsel %vm1316, %v1300, %v644
      %v1334 = vsel %vm1316, %v1301, %v646
      %v1335 = vsel %vm1316, %v1302, %v648
      %v1336 = vsel %vm1316, %v1303, %v650
      %v1337 = vsel %vm1316, %v1304, %v652
      %v1338 = vsel %vm1316, %v1305, %v654
      %v1339 = vsel %vm1316, %v1306, %v656
      %v1340 = vsel %vm1316, %v1307, %v658
      %v1341 = vsel %vm1316, %v1308, %v660
      %v1342 = vsel %vm1316, %v1309, %v662
      %v1343 = vsel %vm1316, %v1310, %v664
      %v1344 = vsel %vm1316, %v1311, %v666
      %v1345 = vsel %vm1316, %v1312, %v668
      %v1346 = vsel %vm1316, %v1313, %v670
      %v1347 = vsel %vm1316, %v1314, %v672
      %v1348 = vsel %vm1316, %v1315, %v674
      %vm1349 = vcmask 97280
      %v1350 = vsel %vm1349, %v1317, %v708
      %v1351 = vsel %vm1349, %v1318, %v710
      %v1352 = vsel %vm1349, %v1319, %v712
      %v1353 = vsel %vm1349, %v1320, %v714
      %v1354 = vsel %vm1349, %v1321, %v716
      %v1355 = vsel %vm1349, %v1322, %v718
      %v1356 = vsel %vm1349, %v1323, %v720
      %v1357 = vsel %vm1349, %v1324, %v722
      %v1358 = vsel %vm1349, %v1325, %v724
      %v1359 = vsel %vm1349, %v1326, %v726
      %v1360 = vsel %vm1349, %v1327, %v728
      %v1361 = vsel %vm1349, %v1328, %v730
      %v1362 = vsel %vm1349, %v1329, %v732
      %v1363 = vsel %vm1349, %v1330, %v734
      %v1364 = vsel %vm1349, %v1331, %v736
      %v1365 = vsel %vm1349, %v1332, %v738
      %v1366 = vsel %vm1349, %v1333, %v740
      %v1367 = vsel %vm1349, %v1334, %v742
      %v1368 = vsel %vm1349, %v1335, %v744
      %v1369 = vsel %vm1349, %v1336, %v746
      %v1370 = vsel %vm1349, %v1337, %v748
      %v1371 = vsel %vm1349, %v1338, %v750
      %v1372 = vsel %vm1349, %v1339, %v752
      %v1373 = vsel %vm1349, %v1340, %v754
      %v1374 = vsel %vm1349, %v1341, %v756
      %v1375 = vsel %vm1349, %v1342, %v758
      %v1376 = vsel %vm1349, %v1343, %v760
      %v1377 = vsel %vm1349, %v1344, %v762
      %v1378 = vsel %vm1349, %v1345, %v764
      %v1379 = vsel %vm1349, %v1346, %v766
      %v1380 = vsel %vm1349, %v1347, %v768
      %v1381 = vsel %vm1349, %v1348, %v770
      %vm1382 = vcmask 130048
      %v1383 = vsel %vm1382, %v1350, %v804
      %v1384 = vsel %vm1382, %v1351, %v806
      %v1385 = vsel %vm1382, %v1352, %v808
      %v1386 = vsel %vm1382, %v1353, %v810
      %v1387 = vsel %vm1382, %v1354, %v812
      %v1388 = vsel %vm1382, %v1355, %v814
      %v1389 = vsel %vm1382, %v1356, %v816
      %v1390 = vsel %vm1382, %v1357, %v818
      %v1391 = vsel %vm1382, %v1358, %v820
      %v1392 = vsel %vm1382, %v1359, %v822
      %v1393 = vsel %vm1382, %v1360, %v824
      %v1394 = vsel %vm1382, %v1361, %v826
      %v1395 = vsel %vm1382, %v1362, %v828
      %v1396 = vsel %vm1382, %v1363, %v830
      %v1397 = vsel %vm1382, %v1364, %v832
      %v1398 = vsel %vm1382, %v1365, %v834
      %v1399 = vsel %vm1382, %v1366, %v836
      %v1400 = vsel %vm1382, %v1367, %v838
      %v1401 = vsel %vm1382, %v1368, %v840
      %v1402 = vsel %vm1382, %v1369, %v842
      %v1403 = vsel %vm1382, %v1370, %v844
      %v1404 = vsel %vm1382, %v1371, %v846
      %v1405 = vsel %vm1382, %v1372, %v848
      %v1406 = vsel %vm1382, %v1373, %v850
      %v1407 = vsel %vm1382, %v1374, %v852
      %v1408 = vsel %vm1382, %v1375, %v854
      %v1409 = vsel %vm1382, %v1376, %v856
      %v1410 = vsel %vm1382, %v1377, %v858
      %v1411 = vsel %vm1382, %v1378, %v860
      %v1412 = vsel %vm1382, %v1379, %v862
      %v1413 = vsel %vm1382, %v1380, %v864
      %v1414 = vsel %vm1382, %v1381, %v866
      %vm1415 = vcmask 162816
      %v1416 = vsel %vm1415, %v1383, %v900
      %v1417 = vsel %vm1415, %v1384, %v902
      %v1418 = vsel %vm1415, %v1385, %v904
      %v1419 = vsel %vm1415, %v1386, %v906
      %v1420 = vsel %vm1415, %v1387, %v908
      %v1421 = vsel %vm1415, %v1388, %v910
      %v1422 = vsel %vm1415, %v1389, %v912
      %v1423 = vsel %vm1415, %v1390, %v914
      %v1424 = vsel %vm1415, %v1391, %v916
      %v1425 = vsel %vm1415, %v1392, %v918
      %v1426 = vsel %vm1415, %v1393, %v920
      %v1427 = vsel %vm1415, %v1394, %v922
      %v1428 = vsel %vm1415, %v1395, %v924
      %v1429 = vsel %vm1415, %v1396, %v926
      %v1430 = vsel %vm1415, %v1397, %v928
      %v1431 = vsel %vm1415, %v1398, %v930
      %v1432 = vsel %vm1415, %v1399, %v932
      %v1433 = vsel %vm1415, %v1400, %v934
      %v1434 = vsel %vm1415, %v1401, %v936
      %v1435 = vsel %vm1415, %v1402, %v938
      %v1436 = vsel %vm1415, %v1403, %v940
      %v1437 = vsel %vm1415, %v1404, %v942
      %v1438 = vsel %vm1415, %v1405, %v944
      %v1439 = vsel %vm1415, %v1406, %v946
      %v1440 = vsel %vm1415, %v1407, %v948
      %v1441 = vsel %vm1415, %v1408, %v950
      %v1442 = vsel %vm1415, %v1409, %v952
      %v1443 = vsel %vm1415, %v1410, %v954
      %v1444 = vsel %vm1415, %v1411, %v956
      %v1445 = vsel %vm1415, %v1412, %v958
      %v1446 = vsel %vm1415, %v1413, %v960
      %v1447 = vsel %vm1415, %v1414, %v962
      %vm1448 = vcmask 195584
      %v1449 = vsel %vm1448, %v1416, %v996
      %v1450 = vsel %vm1448, %v1417, %v998
      %v1451 = vsel %vm1448, %v1418, %v1000
      %v1452 = vsel %vm1448, %v1419, %v1002
      %v1453 = vsel %vm1448, %v1420, %v1004
      %v1454 = vsel %vm1448, %v1421, %v1006
      %v1455 = vsel %vm1448, %v1422, %v1008
      %v1456 = vsel %vm1448, %v1423, %v1010
      %v1457 = vsel %vm1448, %v1424, %v1012
      %v1458 = vsel %vm1448, %v1425, %v1014
      %v1459 = vsel %vm1448, %v1426, %v1016
      %v1460 = vsel %vm1448, %v1427, %v1018
      %v1461 = vsel %vm1448, %v1428, %v1020
      %v1462 = vsel %vm1448, %v1429, %v1022
      %v1463 = vsel %vm1448, %v1430, %v1024
      %v1464 = vsel %vm1448, %v1431, %v1026
      %v1465 = vsel %vm1448, %v1432, %v1028
      %v1466 = vsel %vm1448, %v1433, %v1030
      %v1467 = vsel %vm1448, %v1434, %v1032
      %v1468 = vsel %vm1448, %v1435, %v1034
      %v1469 = vsel %vm1448, %v1436, %v1036
      %v1470 = vsel %vm1448, %v1437, %v1038
      %v1471 = vsel %vm1448, %v1438, %v1040
      %v1472 = vsel %vm1448, %v1439, %v1042
      %v1473 = vsel %vm1448, %v1440, %v1044
      %v1474 = vsel %vm1448, %v1441, %v1046
      %v1475 = vsel %vm1448, %v1442, %v1048
      %v1476 = vsel %vm1448, %v1443, %v1050
      %v1477 = vsel %vm1448, %v1444, %v1052
      %v1478 = vsel %vm1448, %v1445, %v1054
      %v1479 = vsel %vm1448, %v1446, %v1056
      %v1480 = vsel %vm1448, %v1447, %v1058
      %vm1481 = vcmask 228352
      %v1482 = vsel %vm1481, %v1449, %v1092
      %v1483 = vsel %vm1481, %v1450, %v1094
      %v1484 = vsel %vm1481, %v1451, %v1096
      %v1485 = vsel %vm1481, %v1452, %v1098
      %v1486 = vsel %vm1481, %v1453, %v1100
      %v1487 = vsel %vm1481, %v1454, %v1102
      %v1488 = vsel %vm1481, %v1455, %v1104
      %v1489 = vsel %vm1481, %v1456, %v1106
      %v1490 = vsel %vm1481, %v1457, %v1108
      %v1491 = vsel %vm1481, %v1458, %v1110
      %v1492 = vsel %vm1481, %v1459, %v1112
      %v1493 = vsel %vm1481, %v1460, %v1114
      %v1494 = vsel %vm1481, %v1461, %v1116
      %v1495 = vsel %vm1481, %v1462, %v1118
      %v1496 = vsel %vm1481, %v1463, %v1120
      %v1497 = vsel %vm1481, %v1464, %v1122
      %v1498 = vsel %vm1481, %v1465, %v1124
      %v1499 = vsel %vm1481, %v1466, %v1126
      %v1500 = vsel %vm1481, %v1467, %v1128
      %v1501 = vsel %vm1481, %v1468, %v1130
      %v1502 = vsel %vm1481, %v1469, %v1132
      %v1503 = vsel %vm1481, %v1470, %v1134
      %v1504 = vsel %vm1481, %v1471, %v1136
      %v1505 = vsel %vm1481, %v1472, %v1138
      %v1506 = vsel %vm1481, %v1473, %v1140
      %v1507 = vsel %vm1481, %v1474, %v1142
      %v1508 = vsel %vm1481, %v1475, %v1144
      %v1509 = vsel %vm1481, %v1476, %v1146
      %v1510 = vsel %vm1481, %v1477, %v1148
      %v1511 = vsel %vm1481, %v1478, %v1150
      %v1512 = vsel %vm1481, %v1479, %v1152
      %v1513 = vsel %vm1481, %v1480, %v1154
      %vm1514 = vcmask 261120
      %v1515 = vsel %vm1514, %v1482, %v1188
      %v1516 = vsel %vm1514, %v1483, %v1190
      %v1517 = vsel %vm1514, %v1484, %v1192
      %v1518 = vsel %vm1514, %v1485, %v1194
      %v1519 = vsel %vm1514, %v1486, %v1196
      %v1520 = vsel %vm1514, %v1487, %v1198
      %v1521 = vsel %vm1514, %v1488, %v1200
      %v1522 = vsel %vm1514, %v1489, %v1202
      %v1523 = vsel %vm1514, %v1490, %v1204
      %v1524 = vsel %vm1514, %v1491, %v1206
      %v1525 = vsel %vm1514, %v1492, %v1208
      %v1526 = vsel %vm1514, %v1493, %v1210
      %v1527 = vsel %vm1514, %v1494, %v1212
      %v1528 = vsel %vm1514, %v1495, %v1214
      %v1529 = vsel %vm1514, %v1496, %v1216
      %v1530 = vsel %vm1514, %v1497, %v1218
      %v1531 = vsel %vm1514, %v1498, %v1220
      %v1532 = vsel %vm1514, %v1499, %v1222
      %v1533 = vsel %vm1514, %v1500, %v1224
      %v1534 = vsel %vm1514, %v1501, %v1226
      %v1535 = vsel %vm1514, %v1502, %v1228
      %v1536 = vsel %vm1514, %v1503, %v1230
      %v1537 = vsel %vm1514, %v1504, %v1232
      %v1538 = vsel %vm1514, %v1505, %v1234
      %v1539 = vsel %vm1514, %v1506, %v1236
      %v1540 = vsel %vm1514, %v1507, %v1238
      %v1541 = vsel %vm1514, %v1508, %v1240
      %v1542 = vsel %vm1514, %v1509, %v1242
      %v1543 = vsel %vm1514, %v1510, %v1244
      %v1544 = vsel %vm1514, %v1511, %v1246
      %v1545 = vsel %vm1514, %v1512, %v1248
      %v1546 = vsel %vm1514, %v1513, %v1250
      %v1547 = vld [vmem:[%s1] sm:$0xff]
      %v1548 = vld [vmem:[%s1 + $0x8] sm:$0xff]
      %v1549 = vld [vmem:[%s1 + $0x10] sm:$0xff]
      %v1550 = vld [vmem:[%s1 + $0x18] sm:$0xff]
      %v1551 = vld [vmem:[%s1 + $0x20] sm:$0xf]
      %v1552 = vld [vmem:[%s2] sm:$0x1]
      %v1554 = vperm.slane %v1552, 0
      %vm1556 = vcmask 293888
      %v1558 = vsel %vm1556, %v1515, 0
      %v1561 = vsel %vm1556, %v1516, 0
      %v1564 = vsel %vm1556, %v1517, 0
      %v1567 = vsel %vm1556, %v1518, 0
      %v1570 = vsel %vm1556, %v1519, 0
      %v1573 = vsel %vm1556, %v1520, 0
      %v1576 = vsel %vm1556, %v1521, 0
      %v1579 = vsel %vm1556, %v1522, 0
      %v1582 = vsel %vm1556, %v1523, 0
      %v1585 = vsel %vm1556, %v1524, 0
      %v1588 = vsel %vm1556, %v1525, 0
      %v1591 = vsel %vm1556, %v1526, 0
      %v1594 = vsel %vm1556, %v1527, 0
      %v1597 = vsel %vm1556, %v1528, 0
      %v1600 = vsel %vm1556, %v1529, 0
      %v1603 = vsel %vm1556, %v1530, 0
      %v1606 = vsel %vm1556, %v1531, 0
      %v1609 = vsel %vm1556, %v1532, 0
      %v1612 = vsel %vm1556, %v1533, 0
      %v1615 = vsel %vm1556, %v1534, 0
      %v1618 = vsel %vm1556, %v1535, 0
      %v1621 = vsel %vm1556, %v1536, 0
      %v1624 = vsel %vm1556, %v1537, 0
      %v1627 = vsel %vm1556, %v1538, 0
      %v1630 = vsel %vm1556, %v1539, 0
      %v1633 = vsel %vm1556, %v1540, 0
      %v1636 = vsel %vm1556, %v1541, 0
      %v1639 = vsel %vm1556, %v1542, 0
      %v1642 = vsel %vm1556, %v1543, 0
      %v1645 = vsel %vm1556, %v1544, 0
      %v1648 = vsel %vm1556, %v1545, 0
      %v1651 = vsel %vm1556, %v1546, 0
      %vm1653 = vcmask 1043456
      %v1655 = vsel %vm1653, %v1551, 0
      %1657 = vmatpush.msra.mxu0 0.0
      %1658 = vmatpush.msra.mxu0 0.0
      %1659 = vmatpush.msra.mxu0 0.0
      %1660 = vmatpush.msra.mxu0 0.0
      %1661 = vmatpush.msra.mxu0 0.0
      %1662 = vmatpush.msra.mxu0 0.0
      %1663 = vmatpush.msra.mxu0 0.0
      %1664 = vmatpush.msra.mxu0 0.0
      %1665 = vmatpush.msra.mxu0 0.0
      %1666 = vmatpush.msra.mxu0 0.0
      %1667 = vmatpush.msra.mxu0 0.0
      %1668 = vmatpush.msra.mxu0 %v1655
      %1669 = vmatpush.msra.mxu0 %v1550
      %1670 = vmatpush.msra.mxu0 %v1549
      %1671 = vmatpush.msra.mxu0 %v1548
      %1672 = vmatpush.msra.mxu0 %v1547
      %1673 = vmatmul.f32.gmra.mxu0 %v1558
      %v1674 = vpop.f32.mrf.mxu0
      %v1675 = vadd.f32 %v1554, %v1674
      %1676 = vmatmul.f32.gmra.mxu0 %v1561
      %v1677 = vpop.f32.mrf.mxu0
      %v1678 = vadd.f32 %v1554, %v1677
      %1679 = vmatmul.f32.gmra.mxu0 %v1564
      %v1680 = vpop.f32.mrf.mxu0
      %v1681 = vadd.f32 %v1554, %v1680
      %1682 = vmatmul.f32.gmra.mxu0 %v1567
      %v1683 = vpop.f32.mrf.mxu0
      %v1684 = vadd.f32 %v1554, %v1683
      %1685 = vmatmul.f32.gmra.mxu0 %v1570
      %v1686 = vpop.f32.mrf.mxu0
      %v1687 = vadd.f32 %v1554, %v1686
      %1688 = vmatmul.f32.gmra.mxu0 %v1573
      %v1689 = vpop.f32.mrf.mxu0
      %v1690 = vadd.f32 %v1554, %v1689
      %1691 = vmatmul.f32.gmra.mxu0 %v1576
      %v1692 = vpop.f32.mrf.mxu0
      %v1693 = vadd.f32 %v1554, %v1692
      %1694 = vmatmul.f32.gmra.mxu0 %v1579
      %v1695 = vpop.f32.mrf.mxu0
      %v1696 = vadd.f32 %v1554, %v1695
      %1697 = vmatmul.f32.gmra.mxu0 %v1582
      %v1698 = vpop.f32.mrf.mxu0
      %v1699 = vadd.f32 %v1554, %v1698
      %1700 = vmatmul.f32.gmra.mxu0 %v1585
      %v1701 = vpop.f32.mrf.mxu0
      %v1702 = vadd.f32 %v1554, %v1701
      %1703 = vmatmul.f32.gmra.mxu0 %v1588
      %v1704 = vpop.f32.mrf.mxu0
      %v1705 = vadd.f32 %v1554, %v1704
      %1706 = vmatmul.f32.gmra.mxu0 %v1591
      %v1707 = vpop.f32.mrf.mxu0
      %v1708 = vadd.f32 %v1554, %v1707
      %1709 = vmatmul.f32.gmra.mxu0 %v1594
      %v1710 = vpop.f32.mrf.mxu0
      %v1711 = vadd.f32 %v1554, %v1710
      %1712 = vmatmul.f32.gmra.mxu0 %v1597
      %v1713 = vpop.f32.mrf.mxu0
      %v1714 = vadd.f32 %v1554, %v1713
      %1715 = vmatmul.f32.gmra.mxu0 %v1600
      %v1716 = vpop.f32.mrf.mxu0
      %v1717 = vadd.f32 %v1554, %v1716
      %1718 = vmatmul.f32.gmra.mxu0 %v1603
      %v1719 = vpop.f32.mrf.mxu0
      %v1720 = vadd.f32 %v1554, %v1719
      %1721 = vmatmul.f32.gmra.mxu0 %v1606
      %v1722 = vpop.f32.mrf.mxu0
      %v1723 = vadd.f32 %v1554, %v1722
      %1724 = vmatmul.f32.gmra.mxu0 %v1609
      %v1725 = vpop.f32.mrf.mxu0
      %v1726 = vadd.f32 %v1554, %v1725
      %1727 = vmatmul.f32.gmra.mxu0 %v1612
      %v1728 = vpop.f32.mrf.mxu0
      %v1729 = vadd.f32 %v1554, %v1728
      %1730 = vmatmul.f32.gmra.mxu0 %v1615
      %v1731 = vpop.f32.mrf.mxu0
      %v1732 = vadd.f32 %v1554, %v1731
      %1733 = vmatmul.f32.gmra.mxu0 %v1618
      %v1734 = vpop.f32.mrf.mxu0
      %v1735 = vadd.f32 %v1554, %v1734
      %1736 = vmatmul.f32.gmra.mxu0 %v1621
      %v1737 = vpop.f32.mrf.mxu0
      %v1738 = vadd.f32 %v1554, %v1737
      %1739 = vmatmul.f32.gmra.mxu0 %v1624
      %v1740 = vpop.f32.mrf.mxu0
      %v1741 = vadd.f32 %v1554, %v1740
      %1742 = vmatmul.f32.gmra.mxu0 %v1627
      %v1743 = vpop.f32.mrf.mxu0
      %v1744 = vadd.f32 %v1554, %v1743
      %1745 = vmatmul.f32.gmra.mxu0 %v1630
      %v1746 = vpop.f32.mrf.mxu0
      %v1747 = vadd.f32 %v1554, %v1746
      %1748 = vmatmul.f32.gmra.mxu0 %v1633
      %v1749 = vpop.f32.mrf.mxu0
      %v1750 = vadd.f32 %v1554, %v1749
      %1751 = vmatmul.f32.gmra.mxu0 %v1636
      %v1752 = vpop.f32.mrf.mxu0
      %v1753 = vadd.f32 %v1554, %v1752
      %1754 = vmatmul.f32.gmra.mxu0 %v1639
      %v1755 = vpop.f32.mrf.mxu0
      %v1756 = vadd.f32 %v1554, %v1755
      %1757 = vmatmul.f32.gmra.mxu0 %v1642
      %v1758 = vpop.f32.mrf.mxu0
      %v1759 = vadd.f32 %v1554, %v1758
      %1760 = vmatmul.f32.gmra.mxu0 %v1645
      %v1761 = vpop.f32.mrf.mxu0
      %v1762 = vadd.f32 %v1554, %v1761
      %1763 = vmatmul.f32.gmra.mxu0 %v1648
      %v1764 = vpop.f32.mrf.mxu0
      %v1765 = vadd.f32 %v1554, %v1764
      %1766 = vmatmul.f32.gmra.mxu0 %v1651
      %v1767 = vpop.f32.mrf.mxu0
      %v1768 = vadd.f32 %v1554, %v1767
      %1769 = vdwg.mxu0
      %v1770 = vmax.f32 %v1675, 0.0
      %v1771 = vmax.f32 %v1678, 0.0
      %v1772 = vmax.f32 %v1681, 0.0
      %v1773 = vmax.f32 %v1684, 0.0
      %v1774 = vmax.f32 %v1687, 0.0
      %v1775 = vmax.f32 %v1690, 0.0
      %v1776 = vmax.f32 %v1693, 0.0
      %v1777 = vmax.f32 %v1696, 0.0
      %v1778 = vmax.f32 %v1699, 0.0
      %v1779 = vmax.f32 %v1702, 0.0
      %v1780 = vmax.f32 %v1705, 0.0
      %v1781 = vmax.f32 %v1708, 0.0
      %v1782 = vmax.f32 %v1711, 0.0
      %v1783 = vmax.f32 %v1714, 0.0
      %v1784 = vmax.f32 %v1717, 0.0
      %v1785 = vmax.f32 %v1720, 0.0
      %v1786 = vmax.f32 %v1723, 0.0
      %v1787 = vmax.f32 %v1726, 0.0
      %v1788 = vmax.f32 %v1729, 0.0
      %v1789 = vmax.f32 %v1732, 0.0
      %v1790 = vmax.f32 %v1735, 0.0
      %v1791 = vmax.f32 %v1738, 0.0
      %v1792 = vmax.f32 %v1741, 0.0
      %v1793 = vmax.f32 %v1744, 0.0
      %v1794 = vmax.f32 %v1747, 0.0
      %v1795 = vmax.f32 %v1750, 0.0
      %v1796 = vmax.f32 %v1753, 0.0
      %v1797 = vmax.f32 %v1756, 0.0
      %v1798 = vmax.f32 %v1759, 0.0
      %v1799 = vmax.f32 %v1762, 0.0
      %v1800 = vmax.f32 %v1765, 0.0
      %v1801 = vmax.f32 %v1768, 0.0
      %1802 = vst.msk [vmem:[#allocation2] sm:$0xff] %vm1316, 0.0
      %1803 = vst.msk [vmem:[#allocation2 + $0x8] sm:$0xff] %vm1316, 0.0
      %vm1804 = vcmask 58368
      %1805 = vst.msk [vmem:[#allocation2 + $0x10] sm:$0x3] %vm1804, 0.0
      %s1806 = scalar_lea.vmem [#allocation2], 408
      %1807 = vst.msk [vmem:[%s1806] sm:$0xff] %vm1316, 0.0
      %1808 = vst.msk [vmem:[%s1806 + $0x8] sm:$0xff] %vm1316, 0.0
      %1809 = vst.msk [vmem:[%s1806 + $0x10] sm:$0x3] %vm1804, 0.0
      %vm1810 = vcmask 57344
      %1811 = vst.msk [vmem:[#allocation2] sm:$0x1] %vm1810, 0.0
      %1812 = vst.msk [vmem:[#allocation2 + $0x18] sm:$0x1] %vm1810, 0.0
      %1813 = vst.msk [vmem:[#allocation2 + $0x30] sm:$0x1] %vm1810, 0.0
      %1814 = vst.msk [vmem:[#allocation2 + $0x48] sm:$0x1] %vm1810, 0.0
      %1815 = vst.msk [vmem:[#allocation2 + $0x60] sm:$0x1] %vm1810, 0.0
      %1816 = vst.msk [vmem:[#allocation2 + $0x78] sm:$0x1] %vm1810, 0.0
      %1817 = vst.msk [vmem:[#allocation2 + $0x90] sm:$0x1] %vm1810, 0.0
      %1818 = vst.msk [vmem:[#allocation2 + $0xa8] sm:$0x1] %vm1810, 0.0
      %1819 = vst.msk [vmem:[#allocation2 + $0xc0] sm:$0x1] %vm1810, 0.0
      %1820 = vst.msk [vmem:[#allocation2 + $0xd8] sm:$0x1] %vm1810, 0.0
      %1821 = vst.msk [vmem:[#allocation2 + $0xf0] sm:$0x1] %vm1810, 0.0
      %1822 = vst.msk [vmem:[#allocation2 + $0x108] sm:$0x1] %vm1810, 0.0
      %1823 = vst.msk [vmem:[#allocation2 + $0x120] sm:$0x1] %vm1810, 0.0
      %1824 = vst.msk [vmem:[#allocation2 + $0x138] sm:$0x1] %vm1810, 0.0
      %1825 = vst.msk [vmem:[#allocation2 + $0x150] sm:$0x1] %vm1810, 0.0
      %1826 = vst.msk [vmem:[#allocation2 + $0x168] sm:$0x1] %vm1810, 0.0
      %1827 = vst.msk [vmem:[#allocation2 + $0x180] sm:$0x1] %vm1810, 0.0
      %1828 = vst.msk [vmem:[#allocation2 + $0x198] sm:$0x1] %vm1810, 0.0
      %1829 = vst.msk [vmem:[#allocation2 + $0x11] sm:$0x1] %vm1810, 0.0
      %1830 = vst.msk [vmem:[#allocation2 + $0x29] sm:$0x1] %vm1810, 0.0
      %1831 = vst.msk [vmem:[#allocation2 + $0x41] sm:$0x1] %vm1810, 0.0
      %1832 = vst.msk [vmem:[#allocation2 + $0x59] sm:$0x1] %vm1810, 0.0
      %1833 = vst.msk [vmem:[#allocation2 + $0x71] sm:$0x1] %vm1810, 0.0
      %1834 = vst.msk [vmem:[#allocation2 + $0x89] sm:$0x1] %vm1810, 0.0
      %1835 = vst.msk [vmem:[#allocation2 + $0xa1] sm:$0x1] %vm1810, 0.0
      %1836 = vst.msk [vmem:[#allocation2 + $0xb9] sm:$0x1] %vm1810, 0.0
      %1837 = vst.msk [vmem:[#allocation2 + $0xd1] sm:$0x1] %vm1810, 0.0
      %1838 = vst.msk [vmem:[#allocation2 + $0xe9] sm:$0x1] %vm1810, 0.0
      %1839 = vst.msk [vmem:[#allocation2 + $0x101] sm:$0x1] %vm1810, 0.0
      %1840 = vst.msk [vmem:[#allocation2 + $0x119] sm:$0x1] %vm1810, 0.0
      %1841 = vst.msk [vmem:[#allocation2 + $0x131] sm:$0x1] %vm1810, 0.0
      %1842 = vst.msk [vmem:[#allocation2 + $0x149] sm:$0x1] %vm1810, 0.0
      %1843 = vst.msk [vmem:[#allocation2 + $0x161] sm:$0x1] %vm1810, 0.0
      %1844 = vst.msk [vmem:[#allocation2 + $0x179] sm:$0x1] %vm1810, 0.0
      %1845 = vst.msk [vmem:[#allocation2 + $0x191] sm:$0x1] %vm1810, 0.0
      %1846 = vst.msk [vmem:[#allocation2 + $0x1a9] sm:$0x1] %vm1810, 0.0
      %s1847 = scalar_lea.vmem [#allocation2], 24
      %1848 = vst.msk [vmem:[%s1847 + $0x1] sm:$0xff] %vm1316, %v1770
      %1849 = vst.msk [vmem:[%s1847 + $0x9] sm:$0xff] %vm1316, %v1771
      %1850 = vst.msk [vmem:[%s1847 + $0x19] sm:$0xff] %vm1316, %v1772
      %1851 = vst.msk [vmem:[%s1847 + $0x21] sm:$0xff] %vm1316, %v1773
      %1852 = vst.msk [vmem:[%s1847 + $0x31] sm:$0xff] %vm1316, %v1774
      %1853 = vst.msk [vmem:[%s1847 + $0x39] sm:$0xff] %vm1316, %v1775
      %1854 = vst.msk [vmem:[%s1847 + $0x49] sm:$0xff] %vm1316, %v1776
      %1855 = vst.msk [vmem:[%s1847 + $0x51] sm:$0xff] %vm1316, %v1777
      %1856 = vst.msk [vmem:[%s1847 + $0x61] sm:$0xff] %vm1316, %v1778
      %1857 = vst.msk [vmem:[%s1847 + $0x69] sm:$0xff] %vm1316, %v1779
      %1858 = vst.msk [vmem:[%s1847 + $0x79] sm:$0xff] %vm1316, %v1780
      %1859 = vst.msk [vmem:[%s1847 + $0x81] sm:$0xff] %vm1316, %v1781
      %1860 = vst.msk [vmem:[%s1847 + $0x91] sm:$0xff] %vm1316, %v1782
      %1861 = vst.msk [vmem:[%s1847 + $0x99] sm:$0xff] %vm1316, %v1783
      %1862 = vst.msk [vmem:[%s1847 + $0xa9] sm:$0xff] %vm1316, %v1784
      %1863 = vst.msk [vmem:[%s1847 + $0xb1] sm:$0xff] %vm1316, %v1785
      %1864 = vst.msk [vmem:[%s1847 + $0xc1] sm:$0xff] %vm1316, %v1786
      %1865 = vst.msk [vmem:[%s1847 + $0xc9] sm:$0xff] %vm1316, %v1787
      %1866 = vst.msk [vmem:[%s1847 + $0xd9] sm:$0xff] %vm1316, %v1788
      %1867 = vst.msk [vmem:[%s1847 + $0xe1] sm:$0xff] %vm1316, %v1789
      %1868 = vst.msk [vmem:[%s1847 + $0xf1] sm:$0xff] %vm1316, %v1790
      %1869 = vst.msk [vmem:[%s1847 + $0xf9] sm:$0xff] %vm1316, %v1791
      %1870 = vst.msk [vmem:[%s1847 + $0x109] sm:$0xff] %vm1316, %v1792
      %1871 = vst.msk [vmem:[%s1847 + $0x111] sm:$0xff] %vm1316, %v1793
      %1872 = vst.msk [vmem:[%s1847 + $0x121] sm:$0xff] %vm1316, %v1794
      %1873 = vst.msk [vmem:[%s1847 + $0x129] sm:$0xff] %vm1316, %v1795
      %1874 = vst.msk [vmem:[%s1847 + $0x139] sm:$0xff] %vm1316, %v1796
      %1875 = vst.msk [vmem:[%s1847 + $0x141] sm:$0xff] %vm1316, %v1797
      %1876 = vst.msk [vmem:[%s1847 + $0x151] sm:$0xff] %vm1316, %v1798
      %1877 = vst.msk [vmem:[%s1847 + $0x159] sm:$0xff] %vm1316, %v1799
      %1878 = vst.msk [vmem:[%s1847 + $0x169] sm:$0xff] %vm1316, %v1800
      %1879 = vst.msk [vmem:[%s1847 + $0x171] sm:$0xff] %vm1316, %v1801
      %v1880 = vld [vmem:[#allocation2] sm:$0xff]
      %v1881 = vld [vmem:[#allocation2 + $0x8] sm:$0xff]
      %v1882 = vld [vmem:[#allocation2 + $0x10] sm:$0x3]
      %v1883 = vld [vmem:[#allocation2 + $0x18] sm:$0xff]
      %v1884 = vld [vmem:[#allocation2 + $0x20] sm:$0xff]
      %v1885 = vld [vmem:[#allocation2 + $0x28] sm:$0x3]
      %v1886 = vld [vmem:[#allocation2 + $0x30] sm:$0xff]
      %v1887 = vld [vmem:[#allocation2 + $0x38] sm:$0xff]
      %v1888 = vld [vmem:[#allocation2 + $0x40] sm:$0x3]
      %v1889 = vld [vmem:[#allocation2 + $0x48] sm:$0xff]
      %v1890 = vld [vmem:[#allocation2 + $0x50] sm:$0xff]
      %v1891 = vld [vmem:[#allocation2 + $0x58] sm:$0x3]
      %v1892 = vld [vmem:[#allocation2 + $0x60] sm:$0xff]
      %v1893 = vld [vmem:[#allocation2 + $0x68] sm:$0xff]
      %v1894 = vld [vmem:[#allocation2 + $0x70] sm:$0x3]
      %v1895 = vld [vmem:[#allocation2 + $0x78] sm:$0xff]
      %v1896 = vld [vmem:[#allocation2 + $0x80] sm:$0xff]
      %v1897 = vld [vmem:[#allocation2 + $0x88] sm:$0x3]
      %v1898 = vld [vmem:[#allocation2 + $0x90] sm:$0xff]
      %v1899 = vld [vmem:[#allocation2 + $0x98] sm:$0xff]
      %v1900 = vld [vmem:[#allocation2 + $0xa0] sm:$0x3]
      %v1901 = vld [vmem:[#allocation2 + $0xa8] sm:$0xff]
      %v1902 = vld [vmem:[#allocation2 + $0xb0] sm:$0xff]
      %v1903 = vld [vmem:[#allocation2 + $0xb8] sm:$0x3]
      %v1904 = vld [vmem:[#allocation2 + $0xc0] sm:$0xff]
      %v1905 = vld [vmem:[#allocation2 + $0xc8] sm:$0xff]
      %v1906 = vld [vmem:[#allocation2 + $0xd0] sm:$0x3]
      %v1907 = vld [vmem:[#allocation2 + $0xd8] sm:$0xff]
      %v1908 = vld [vmem:[#allocation2 + $0xe0] sm:$0xff]
      %v1909 = vld [vmem:[#allocation2 + $0xe8] sm:$0x3]
      %v1910 = vld [vmem:[#allocation2 + $0xf0] sm:$0xff]
      %v1911 = vld [vmem:[#allocation2 + $0xf8] sm:$0xff]
      %v1912 = vld [vmem:[#allocation2 + $0x100] sm:$0x3]
      %v1913 = vld [vmem:[#allocation2 + $0x108] sm:$0xff]
      %v1914 = vld [vmem:[#allocation2 + $0x110] sm:$0xff]
      %v1915 = vld [vmem:[#allocation2 + $0x118] sm:$0x3]
      %v1916 = vld [vmem:[#allocation2 + $0x120] sm:$0xff]
      %v1917 = vld [vmem:[#allocation2 + $0x128] sm:$0xff]
      %v1918 = vld [vmem:[#allocation2 + $0x130] sm:$0x3]
      %v1919 = vld [vmem:[#allocation2 + $0x138] sm:$0xff]
      %v1920 = vld [vmem:[#allocation2 + $0x140] sm:$0xff]
      %v1921 = vld [vmem:[#allocation2 + $0x148] sm:$0x3]
      %v1922 = vld [vmem:[#allocation2 + $0x150] sm:$0xff]
      %v1923 = vld [vmem:[#allocation2 + $0x158] sm:$0xff]
      %v1924 = vld [vmem:[#allocation2 + $0x160] sm:$0x3]
      %v1925 = vld [vmem:[#allocation2 + $0x168] sm:$0xff]
      %v1926 = vld [vmem:[#allocation2 + $0x170] sm:$0xff]
      %v1927 = vld [vmem:[#allocation2 + $0x178] sm:$0x3]
      %v1928 = vld [vmem:[#allocation2 + $0x180] sm:$0xff]
      %v1929 = vld [vmem:[#allocation2 + $0x188] sm:$0xff]
      %v1930 = vld [vmem:[#allocation2 + $0x190] sm:$0x3]
      %v1931 = vld [vmem:[#allocation2 + $0x198] sm:$0xff]
      %v1932 = vld [vmem:[#allocation2 + $0x1a0] sm:$0xff]
      %v1933 = vld [vmem:[#allocation2 + $0x1a8] sm:$0x3]
      %v1982 = vrot.slane %v1880, 1
      %v1983 = vrot.slane %v1881, 1
      %v1984 = vsel %vm327, %v1982, %v1983
      %v1985 = vrot.slane %v1882, 1
      %v1986 = vsel %vm327, %v1983, %v1985
      %v1987 = vrot.slane %v1883, 1
      %v1988 = vrot.slane %v1884, 1
      %v1989 = vsel %vm327, %v1987, %v1988
      %v1990 = vrot.slane %v1885, 1
      %v1991 = vsel %vm327, %v1988, %v1990
      %v1992 = vrot.slane %v1886, 1
      %v1993 = vrot.slane %v1887, 1
      %v1994 = vsel %vm327, %v1992, %v1993
      %v1995 = vrot.slane %v1888, 1
      %v1996 = vsel %vm327, %v1993, %v1995
      %v1997 = vrot.slane %v1889, 1
      %v1998 = vrot.slane %v1890, 1
      %v1999 = vsel %vm327, %v1997, %v1998
      %v2000 = vrot.slane %v1891, 1
      %v2001 = vsel %vm327, %v1998, %v2000
      %v2002 = vrot.slane %v1892, 1
      %v2003 = vrot.slane %v1893, 1
      %v2004 = vsel %vm327, %v2002, %v2003
      %v2005 = vrot.slane %v1894, 1
      %v2006 = vsel %vm327, %v2003, %v2005
      %v2007 = vrot.slane %v1895, 1
      %v2008 = vrot.slane %v1896, 1
      %v2009 = vsel %vm327, %v2007, %v2008
      %v2010 = vrot.slane %v1897, 1
      %v2011 = vsel %vm327, %v2008, %v2010
      %v2012 = vrot.slane %v1898, 1
      %v2013 = vrot.slane %v1899, 1
      %v2014 = vsel %vm327, %v2012, %v2013
      %v2015 = vrot.slane %v1900, 1
      %v2016 = vsel %vm327, %v2013, %v2015
      %v2017 = vrot.slane %v1901, 1
      %v2018 = vrot.slane %v1902, 1
      %v2019 = vsel %vm327, %v2017, %v2018
      %v2020 = vrot.slane %v1903, 1
      %v2021 = vsel %vm327, %v2018, %v2020
      %v2022 = vrot.slane %v1904, 1
      %v2023 = vrot.slane %v1905, 1
      %v2024 = vsel %vm327, %v2022, %v2023
      %v2025 = vrot.slane %v1906, 1
      %v2026 = vsel %vm327, %v2023, %v2025
      %v2027 = vrot.slane %v1907, 1
      %v2028 = vrot.slane %v1908, 1
      %v2029 = vsel %vm327, %v2027, %v2028
      %v2030 = vrot.slane %v1909, 1
      %v2031 = vsel %vm327, %v2028, %v2030
      %v2032 = vrot.slane %v1910, 1
      %v2033 = vrot.slane %v1911, 1
      %v2034 = vsel %vm327, %v2032, %v2033
      %v2035 = vrot.slane %v1912, 1
      %v2036 = vsel %vm327, %v2033, %v2035
      %v2037 = vrot.slane %v1913, 1
      %v2038 = vrot.slane %v1914, 1
      %v2039 = vsel %vm327, %v2037, %v2038
      %v2040 = vrot.slane %v1915, 1
      %v2041 = vsel %vm327, %v2038, %v2040
      %v2042 = vrot.slane %v1916, 1
      %v2043 = vrot.slane %v1917, 1
      %v2044 = vsel %vm327, %v2042, %v2043
      %v2045 = vrot.slane %v1918, 1
      %v2046 = vsel %vm327, %v2043, %v2045
      %v2047 = vrot.slane %v1919, 1
      %v2048 = vrot.slane %v1920, 1
      %v2049 = vsel %vm327, %v2047, %v2048
      %v2050 = vrot.slane %v1921, 1
      %v2051 = vsel %vm327, %v2048, %v2050
      %v2052 = vrot.slane %v1922, 1
      %v2053 = vrot.slane %v1923, 1
      %v2054 = vsel %vm327, %v2052, %v2053
      %v2055 = vrot.slane %v1924, 1
      %v2056 = vsel %vm327, %v2053, %v2055
      %v2057 = vrot.slane %v1925, 1
      %v2058 = vrot.slane %v1926, 1
      %v2059 = vsel %vm327, %v2057, %v2058
      %v2060 = vrot.slane %v1927, 1
      %v2061 = vsel %vm327, %v2058, %v2060
      %v2062 = vrot.slane %v1880, 2
      %v2063 = vrot.slane %v1881, 2
      %v2064 = vsel %vm408, %v2062, %v2063
      %v2065 = vrot.slane %v1882, 2
      %v2066 = vsel %vm408, %v2063, %v2065
      %v2067 = vrot.slane %v1883, 2
      %v2068 = vrot.slane %v1884, 2
      %v2069 = vsel %vm408, %v2067, %v2068
      %v2070 = vrot.slane %v1885, 2
      %v2071 = vsel %vm408, %v2068, %v2070
      %v2072 = vrot.slane %v1886, 2
      %v2073 = vrot.slane %v1887, 2
      %v2074 = vsel %vm408, %v2072, %v2073
      %v2075 = vrot.slane %v1888, 2
      %v2076 = vsel %vm408, %v2073, %v2075
      %v2077 = vrot.slane %v1889, 2
      %v2078 = vrot.slane %v1890, 2
      %v2079 = vsel %vm408, %v2077, %v2078
      %v2080 = vrot.slane %v1891, 2
      %v2081 = vsel %vm408, %v2078, %v2080
      %v2082 = vrot.slane %v1892, 2
      %v2083 = vrot.slane %v1893, 2
      %v2084 = vsel %vm408, %v2082, %v2083
      %v2085 = vrot.slane %v1894, 2
      %v2086 = vsel %vm408, %v2083, %v2085
      %v2087 = vrot.slane %v1895, 2
      %v2088 = vrot.slane %v1896, 2
      %v2089 = vsel %vm408, %v2087, %v2088
      %v2090 = vrot.slane %v1897, 2
      %v2091 = vsel %vm408, %v2088, %v2090
      %v2092 = vrot.slane %v1898, 2
      %v2093 = vrot.slane %v1899, 2
      %v2094 = vsel %vm408, %v2092, %v2093
      %v2095 = vrot.slane %v1900, 2
      %v2096 = vsel %vm408, %v2093, %v2095
      %v2097 = vrot.slane %v1901, 2
      %v2098 = vrot.slane %v1902, 2
      %v2099 = vsel %vm408, %v2097, %v2098
      %v2100 = vrot.slane %v1903, 2
      %v2101 = vsel %vm408, %v2098, %v2100
      %v2102 = vrot.slane %v1904, 2
      %v2103 = vrot.slane %v1905, 2
      %v2104 = vsel %vm408, %v2102, %v2103
      %v2105 = vrot.slane %v1906, 2
      %v2106 = vsel %vm408, %v2103, %v2105
      %v2107 = vrot.slane %v1907, 2
      %v2108 = vrot.slane %v1908, 2
      %v2109 = vsel %vm408, %v2107, %v2108
      %v2110 = vrot.slane %v1909, 2
      %v2111 = vsel %vm408, %v2108, %v2110
      %v2112 = vrot.slane %v1910, 2
      %v2113 = vrot.slane %v1911, 2
      %v2114 = vsel %vm408, %v2112, %v2113
      %v2115 = vrot.slane %v1912, 2
      %v2116 = vsel %vm408, %v2113, %v2115
      %v2117 = vrot.slane %v1913, 2
      %v2118 = vrot.slane %v1914, 2
      %v2119 = vsel %vm408, %v2117, %v2118
      %v2120 = vrot.slane %v1915, 2
      %v2121 = vsel %vm408, %v2118, %v2120
      %v2122 = vrot.slane %v1916, 2
      %v2123 = vrot.slane %v1917, 2
      %v2124 = vsel %vm408, %v2122, %v2123
      %v2125 = vrot.slane %v1918, 2
      %v2126 = vsel %vm408, %v2123, %v2125
      %v2127 = vrot.slane %v1919, 2
      %v2128 = vrot.slane %v1920, 2
      %v2129 = vsel %vm408, %v2127, %v2128
      %v2130 = vrot.slane %v1921, 2
      %v2131 = vsel %vm408, %v2128, %v2130
      %v2132 = vrot.slane %v1922, 2
      %v2133 = vrot.slane %v1923, 2
      %v2134 = vsel %vm408, %v2132, %v2133
      %v2135 = vrot.slane %v1924, 2
      %v2136 = vsel %vm408, %v2133, %v2135
      %v2137 = vrot.slane %v1925, 2
      %v2138 = vrot.slane %v1926, 2
      %v2139 = vsel %vm408, %v2137, %v2138
      %v2140 = vrot.slane %v1927, 2
      %v2141 = vsel %vm408, %v2138, %v2140
      %v2145 = vrot.slane %v1928, 1
      %v2146 = vrot.slane %v1929, 1
      %v2147 = vsel %vm327, %v2145, %v2146
      %v2148 = vrot.slane %v1930, 1
      %v2149 = vsel %vm327, %v2146, %v2148
      %v2150 = vrot.slane %v1928, 2
      %v2151 = vrot.slane %v1929, 2
      %v2152 = vsel %vm408, %v2150, %v2151
      %v2153 = vrot.slane %v1930, 2
      %v2154 = vsel %vm408, %v2151, %v2153
      %v2158 = vrot.slane %v1931, 1
      %v2159 = vrot.slane %v1932, 1
      %v2160 = vsel %vm327, %v2158, %v2159
      %v2161 = vrot.slane %v1933, 1
      %v2162 = vsel %vm327, %v2159, %v2161
      %v2163 = vrot.slane %v1931, 2
      %v2164 = vrot.slane %v1932, 2
      %v2165 = vsel %vm408, %v2163, %v2164
      %v2166 = vrot.slane %v1933, 2
      %v2167 = vsel %vm408, %v2164, %v2166
      %2168 = vrot.lane.b32.xlu0 %v1984, 8
      %v2169 = vpop.permute.xlu0 %2168
      %2170 = vrot.lane.b32.xlu0 %v1986, 8
      %v2171 = vpop.permute.xlu0 %2170
      %2172 = vrot.lane.b32.xlu0 %v1989, 8
      %v2173 = vpop.permute.xlu0 %2172
      %2174 = vrot.lane.b32.xlu0 %v1991, 8
      %v2175 = vpop.permute.xlu0 %2174
      %2176 = vrot.lane.b32.xlu0 %v1994, 8
      %v2177 = vpop.permute.xlu0 %2176
      %2178 = vrot.lane.b32.xlu0 %v1996, 8
      %v2179 = vpop.permute.xlu0 %2178
      %2180 = vrot.lane.b32.xlu0 %v1999, 8
      %v2181 = vpop.permute.xlu0 %2180
      %2182 = vrot.lane.b32.xlu0 %v2001, 8
      %v2183 = vpop.permute.xlu0 %2182
      %2184 = vrot.lane.b32.xlu0 %v2004, 8
      %v2185 = vpop.permute.xlu0 %2184
      %2186 = vrot.lane.b32.xlu0 %v2006, 8
      %v2187 = vpop.permute.xlu0 %2186
      %2188 = vrot.lane.b32.xlu0 %v2009, 8
      %v2189 = vpop.permute.xlu0 %2188
      %2190 = vrot.lane.b32.xlu0 %v2011, 8
      %v2191 = vpop.permute.xlu0 %2190
      %2192 = vrot.lane.b32.xlu0 %v2014, 8
      %v2193 = vpop.permute.xlu0 %2192
      %2194 = vrot.lane.b32.xlu0 %v2016, 8
      %v2195 = vpop.permute.xlu0 %2194
      %2196 = vrot.lane.b32.xlu0 %v2019, 8
      %v2197 = vpop.permute.xlu0 %2196
      %2198 = vrot.lane.b32.xlu0 %v2021, 8
      %v2199 = vpop.permute.xlu0 %2198
      %2200 = vrot.lane.b32.xlu0 %v2024, 8
      %v2201 = vpop.permute.xlu0 %2200
      %2202 = vrot.lane.b32.xlu0 %v2026, 8
      %v2203 = vpop.permute.xlu0 %2202
      %2204 = vrot.lane.b32.xlu0 %v2029, 8
      %v2205 = vpop.permute.xlu0 %2204
      %2206 = vrot.lane.b32.xlu0 %v2031, 8
      %v2207 = vpop.permute.xlu0 %2206
      %2208 = vrot.lane.b32.xlu0 %v2034, 8
      %v2209 = vpop.permute.xlu0 %2208
      %2210 = vrot.lane.b32.xlu0 %v2036, 8
      %v2211 = vpop.permute.xlu0 %2210
      %2212 = vrot.lane.b32.xlu0 %v2039, 8
      %v2213 = vpop.permute.xlu0 %2212
      %2214 = vrot.lane.b32.xlu0 %v2041, 8
      %v2215 = vpop.permute.xlu0 %2214
      %2216 = vrot.lane.b32.xlu0 %v2044, 8
      %v2217 = vpop.permute.xlu0 %2216
      %2218 = vrot.lane.b32.xlu0 %v2046, 8
      %v2219 = vpop.permute.xlu0 %2218
      %2220 = vrot.lane.b32.xlu0 %v2049, 8
      %v2221 = vpop.permute.xlu0 %2220
      %2222 = vrot.lane.b32.xlu0 %v2051, 8
      %v2223 = vpop.permute.xlu0 %2222
      %2224 = vrot.lane.b32.xlu0 %v2054, 8
      %v2225 = vpop.permute.xlu0 %2224
      %2226 = vrot.lane.b32.xlu0 %v2056, 8
      %v2227 = vpop.permute.xlu0 %2226
      %2228 = vrot.lane.b32.xlu0 %v2059, 8
      %v2229 = vpop.permute.xlu0 %2228
      %2230 = vrot.lane.b32.xlu0 %v2061, 8
      %v2231 = vpop.permute.xlu0 %2230
      %2264 = vrot.lane.b32.xlu0 %v2064, 16
      %v2265 = vpop.permute.xlu0 %2264
      %2266 = vrot.lane.b32.xlu0 %v2066, 16
      %v2267 = vpop.permute.xlu0 %2266
      %2268 = vrot.lane.b32.xlu0 %v2069, 16
      %v2269 = vpop.permute.xlu0 %2268
      %2270 = vrot.lane.b32.xlu0 %v2071, 16
      %v2271 = vpop.permute.xlu0 %2270
      %2272 = vrot.lane.b32.xlu0 %v2074, 16
      %v2273 = vpop.permute.xlu0 %2272
      %2274 = vrot.lane.b32.xlu0 %v2076, 16
      %v2275 = vpop.permute.xlu0 %2274
      %2276 = vrot.lane.b32.xlu0 %v2079, 16
      %v2277 = vpop.permute.xlu0 %2276
      %2278 = vrot.lane.b32.xlu0 %v2081, 16
      %v2279 = vpop.permute.xlu0 %2278
      %2280 = vrot.lane.b32.xlu0 %v2084, 16
      %v2281 = vpop.permute.xlu0 %2280
      %2282 = vrot.lane.b32.xlu0 %v2086, 16
      %v2283 = vpop.permute.xlu0 %2282
      %2284 = vrot.lane.b32.xlu0 %v2089, 16
      %v2285 = vpop.permute.xlu0 %2284
      %2286 = vrot.lane.b32.xlu0 %v2091, 16
      %v2287 = vpop.permute.xlu0 %2286
      %2288 = vrot.lane.b32.xlu0 %v2094, 16
      %v2289 = vpop.permute.xlu0 %2288
      %2290 = vrot.lane.b32.xlu0 %v2096, 16
      %v2291 = vpop.permute.xlu0 %2290
      %2292 = vrot.lane.b32.xlu0 %v2099, 16
      %v2293 = vpop.permute.xlu0 %2292
      %2294 = vrot.lane.b32.xlu0 %v2101, 16
      %v2295 = vpop.permute.xlu0 %2294
      %2296 = vrot.lane.b32.xlu0 %v2104, 16
      %v2297 = vpop.permute.xlu0 %2296
      %2298 = vrot.lane.b32.xlu0 %v2106, 16
      %v2299 = vpop.permute.xlu0 %2298
      %2300 = vrot.lane.b32.xlu0 %v2109, 16
      %v2301 = vpop.permute.xlu0 %2300
      %2302 = vrot.lane.b32.xlu0 %v2111, 16
      %v2303 = vpop.permute.xlu0 %2302
      %2304 = vrot.lane.b32.xlu0 %v2114, 16
      %v2305 = vpop.permute.xlu0 %2304
      %2306 = vrot.lane.b32.xlu0 %v2116, 16
      %v2307 = vpop.permute.xlu0 %2306
      %2308 = vrot.lane.b32.xlu0 %v2119, 16
      %v2309 = vpop.permute.xlu0 %2308
      %2310 = vrot.lane.b32.xlu0 %v2121, 16
      %v2311 = vpop.permute.xlu0 %2310
      %2312 = vrot.lane.b32.xlu0 %v2124, 16
      %v2313 = vpop.permute.xlu0 %2312
      %2314 = vrot.lane.b32.xlu0 %v2126, 16
      %v2315 = vpop.permute.xlu0 %2314
      %2316 = vrot.lane.b32.xlu0 %v2129, 16
      %v2317 = vpop.permute.xlu0 %2316
      %2318 = vrot.lane.b32.xlu0 %v2131, 16
      %v2319 = vpop.permute.xlu0 %2318
      %2320 = vrot.lane.b32.xlu0 %v2134, 16
      %v2321 = vpop.permute.xlu0 %2320
      %2322 = vrot.lane.b32.xlu0 %v2136, 16
      %v2323 = vpop.permute.xlu0 %2322
      %2324 = vrot.lane.b32.xlu0 %v2139, 16
      %v2325 = vpop.permute.xlu0 %2324
      %2326 = vrot.lane.b32.xlu0 %v2141, 16
      %v2327 = vpop.permute.xlu0 %2326
      %2360 = vrot.lane.b32.xlu0 %v1883, 24
      %v2361 = vpop.permute.xlu0 %2360
      %2362 = vrot.lane.b32.xlu0 %v1884, 24
      %v2363 = vpop.permute.xlu0 %2362
      %2364 = vrot.lane.b32.xlu0 %v1886, 24
      %v2365 = vpop.permute.xlu0 %2364
      %2366 = vrot.lane.b32.xlu0 %v1887, 24
      %v2367 = vpop.permute.xlu0 %2366
      %2368 = vrot.lane.b32.xlu0 %v1889, 24
      %v2369 = vpop.permute.xlu0 %2368
      %2370 = vrot.lane.b32.xlu0 %v1890, 24
      %v2371 = vpop.permute.xlu0 %2370
      %2372 = vrot.lane.b32.xlu0 %v1892, 24
      %v2373 = vpop.permute.xlu0 %2372
      %2374 = vrot.lane.b32.xlu0 %v1893, 24
      %v2375 = vpop.permute.xlu0 %2374
      %2376 = vrot.lane.b32.xlu0 %v1895, 24
      %v2377 = vpop.permute.xlu0 %2376
      %2378 = vrot.lane.b32.xlu0 %v1896, 24
      %v2379 = vpop.permute.xlu0 %2378
      %2380 = vrot.lane.b32.xlu0 %v1898, 24
      %v2381 = vpop.permute.xlu0 %2380
      %2382 = vrot.lane.b32.xlu0 %v1899, 24
      %v2383 = vpop.permute.xlu0 %2382
      %2384 = vrot.lane.b32.xlu0 %v1901, 24
      %v2385 = vpop.permute.xlu0 %2384
      %2386 = vrot.lane.b32.xlu0 %v1902, 24
      %v2387 = vpop.permute.xlu0 %2386
      %2388 = vrot.lane.b32.xlu0 %v1904, 24
      %v2389 = vpop.permute.xlu0 %2388
      %2390 = vrot.lane.b32.xlu0 %v1905, 24
      %v2391 = vpop.permute.xlu0 %2390
      %2392 = vrot.lane.b32.xlu0 %v1907, 24
      %v2393 = vpop.permute.xlu0 %2392
      %2394 = vrot.lane.b32.xlu0 %v1908, 24
      %v2395 = vpop.permute.xlu0 %2394
      %2396 = vrot.lane.b32.xlu0 %v1910, 24
      %v2397 = vpop.permute.xlu0 %2396
      %2398 = vrot.lane.b32.xlu0 %v1911, 24
      %v2399 = vpop.permute.xlu0 %2398
      %2400 = vrot.lane.b32.xlu0 %v1913, 24
      %v2401 = vpop.permute.xlu0 %2400
      %2402 = vrot.lane.b32.xlu0 %v1914, 24
      %v2403 = vpop.permute.xlu0 %2402
      %2404 = vrot.lane.b32.xlu0 %v1916, 24
      %v2405 = vpop.permute.xlu0 %2404
      %2406 = vrot.lane.b32.xlu0 %v1917, 24
      %v2407 = vpop.permute.xlu0 %2406
      %2408 = vrot.lane.b32.xlu0 %v1919, 24
      %v2409 = vpop.permute.xlu0 %2408
      %2410 = vrot.lane.b32.xlu0 %v1920, 24
      %v2411 = vpop.permute.xlu0 %2410
      %2412 = vrot.lane.b32.xlu0 %v1922, 24
      %v2413 = vpop.permute.xlu0 %2412
      %2414 = vrot.lane.b32.xlu0 %v1923, 24
      %v2415 = vpop.permute.xlu0 %2414
      %2416 = vrot.lane.b32.xlu0 %v1925, 24
      %v2417 = vpop.permute.xlu0 %2416
      %2418 = vrot.lane.b32.xlu0 %v1926, 24
      %v2419 = vpop.permute.xlu0 %2418
      %2420 = vrot.lane.b32.xlu0 %v1928, 24
      %v2421 = vpop.permute.xlu0 %2420
      %2422 = vrot.lane.b32.xlu0 %v1929, 24
      %v2423 = vpop.permute.xlu0 %2422
      %2456 = vrot.lane.b32.xlu0 %v1989, 32
      %v2457 = vpop.permute.xlu0 %2456
      %2458 = vrot.lane.b32.xlu0 %v1991, 32
      %v2459 = vpop.permute.xlu0 %2458
      %2460 = vrot.lane.b32.xlu0 %v1994, 32
      %v2461 = vpop.permute.xlu0 %2460
      %2462 = vrot.lane.b32.xlu0 %v1996, 32
      %v2463 = vpop.permute.xlu0 %2462
      %2464 = vrot.lane.b32.xlu0 %v1999, 32
      %v2465 = vpop.permute.xlu0 %2464
      %2466 = vrot.lane.b32.xlu0 %v2001, 32
      %v2467 = vpop.permute.xlu0 %2466
      %2468 = vrot.lane.b32.xlu0 %v2004, 32
      %v2469 = vpop.permute.xlu0 %2468
      %2470 = vrot.lane.b32.xlu0 %v2006, 32
      %v2471 = vpop.permute.xlu0 %2470
      %2472 = vrot.lane.b32.xlu0 %v2009, 32
      %v2473 = vpop.permute.xlu0 %2472
      %2474 = vrot.lane.b32.xlu0 %v2011, 32
      %v2475 = vpop.permute.xlu0 %2474
      %2476 = vrot.lane.b32.xlu0 %v2014, 32
      %v2477 = vpop.permute.xlu0 %2476
      %2478 = vrot.lane.b32.xlu0 %v2016, 32
      %v2479 = vpop.permute.xlu0 %2478
      %2480 = vrot.lane.b32.xlu0 %v2019, 32
      %v2481 = vpop.permute.xlu0 %2480
      %2482 = vrot.lane.b32.xlu0 %v2021, 32
      %v2483 = vpop.permute.xlu0 %2482
      %2484 = vrot.lane.b32.xlu0 %v2024, 32
      %v2485 = vpop.permute.xlu0 %2484
      %2486 = vrot.lane.b32.xlu0 %v2026, 32
      %v2487 = vpop.permute.xlu0 %2486
      %2488 = vrot.lane.b32.xlu0 %v2029, 32
      %v2489 = vpop.permute.xlu0 %2488
      %2490 = vrot.lane.b32.xlu0 %v2031, 32
      %v2491 = vpop.permute.xlu0 %2490
      %2492 = vrot.lane.b32.xlu0 %v2034, 32
      %v2493 = vpop.permute.xlu0 %2492
      %2494 = vrot.lane.b32.xlu0 %v2036, 32
      %v2495 = vpop.permute.xlu0 %2494
      %2496 = vrot.lane.b32.xlu0 %v2039, 32
      %v2497 = vpop.permute.xlu0 %2496
      %2498 = vrot.lane.b32.xlu0 %v2041, 32
      %v2499 = vpop.permute.xlu0 %2498
      %2500 = vrot.lane.b32.xlu0 %v2044, 32
      %v2501 = vpop.permute.xlu0 %2500
      %2502 = vrot.lane.b32.xlu0 %v2046, 32
      %v2503 = vpop.permute.xlu0 %2502
      %2504 = vrot.lane.b32.xlu0 %v2049, 32
      %v2505 = vpop.permute.xlu0 %2504
      %2506 = vrot.lane.b32.xlu0 %v2051, 32
      %v2507 = vpop.permute.xlu0 %2506
      %2508 = vrot.lane.b32.xlu0 %v2054, 32
      %v2509 = vpop.permute.xlu0 %2508
      %2510 = vrot.lane.b32.xlu0 %v2056, 32
      %v2511 = vpop.permute.xlu0 %2510
      %2512 = vrot.lane.b32.xlu0 %v2059, 32
      %v2513 = vpop.permute.xlu0 %2512
      %2514 = vrot.lane.b32.xlu0 %v2061, 32
      %v2515 = vpop.permute.xlu0 %2514
      %2516 = vrot.lane.b32.xlu0 %v2147, 32
      %v2517 = vpop.permute.xlu0 %2516
      %2518 = vrot.lane.b32.xlu0 %v2149, 32
      %v2519 = vpop.permute.xlu0 %2518
      %2552 = vrot.lane.b32.xlu0 %v2069, 40
      %v2553 = vpop.permute.xlu0 %2552
      %2554 = vrot.lane.b32.xlu0 %v2071, 40
      %v2555 = vpop.permute.xlu0 %2554
      %2556 = vrot.lane.b32.xlu0 %v2074, 40
      %v2557 = vpop.permute.xlu0 %2556
      %2558 = vrot.lane.b32.xlu0 %v2076, 40
      %v2559 = vpop.permute.xlu0 %2558
      %2560 = vrot.lane.b32.xlu0 %v2079, 40
      %v2561 = vpop.permute.xlu0 %2560
      %2562 = vrot.lane.b32.xlu0 %v2081, 40
      %v2563 = vpop.permute.xlu0 %2562
      %2564 = vrot.lane.b32.xlu0 %v2084, 40
      %v2565 = vpop.permute.xlu0 %2564
      %2566 = vrot.lane.b32.xlu0 %v2086, 40
      %v2567 = vpop.permute.xlu0 %2566
      %2568 = vrot.lane.b32.xlu0 %v2089, 40
      %v2569 = vpop.permute.xlu0 %2568
      %2570 = vrot.lane.b32.xlu0 %v2091, 40
      %v2571 = vpop.permute.xlu0 %2570
      %2572 = vrot.lane.b32.xlu0 %v2094, 40
      %v2573 = vpop.permute.xlu0 %2572
      %2574 = vrot.lane.b32.xlu0 %v2096, 40
      %v2575 = vpop.permute.xlu0 %2574
      %2576 = vrot.lane.b32.xlu0 %v2099, 40
      %v2577 = vpop.permute.xlu0 %2576
      %2578 = vrot.lane.b32.xlu0 %v2101, 40
      %v2579 = vpop.permute.xlu0 %2578
      %2580 = vrot.lane.b32.xlu0 %v2104, 40
      %v2581 = vpop.permute.xlu0 %2580
      %2582 = vrot.lane.b32.xlu0 %v2106, 40
      %v2583 = vpop.permute.xlu0 %2582
      %2584 = vrot.lane.b32.xlu0 %v2109, 40
      %v2585 = vpop.permute.xlu0 %2584
      %2586 = vrot.lane.b32.xlu0 %v2111, 40
      %v2587 = vpop.permute.xlu0 %2586
      %2588 = vrot.lane.b32.xlu0 %v2114, 40
      %v2589 = vpop.permute.xlu0 %2588
      %2590 = vrot.lane.b32.xlu0 %v2116, 40
      %v2591 = vpop.permute.xlu0 %2590
      %2592 = vrot.lane.b32.xlu0 %v2119, 40
      %v2593 = vpop.permute.xlu0 %2592
      %2594 = vrot.lane.b32.xlu0 %v2121, 40
      %v2595 = vpop.permute.xlu0 %2594
      %2596 = vrot.lane.b32.xlu0 %v2124, 40
      %v2597 = vpop.permute.xlu0 %2596
      %2598 = vrot.lane.b32.xlu0 %v2126, 40
      %v2599 = vpop.permute.xlu0 %2598
      %2600 = vrot.lane.b32.xlu0 %v2129, 40
      %v2601 = vpop.permute.xlu0 %2600
      %2602 = vrot.lane.b32.xlu0 %v2131, 40
      %v2603 = vpop.permute.xlu0 %2602
      %2604 = vrot.lane.b32.xlu0 %v2134, 40
      %v2605 = vpop.permute.xlu0 %2604
      %2606 = vrot.lane.b32.xlu0 %v2136, 40
      %v2607 = vpop.permute.xlu0 %2606
      %2608 = vrot.lane.b32.xlu0 %v2139, 40
      %v2609 = vpop.permute.xlu0 %2608
      %2610 = vrot.lane.b32.xlu0 %v2141, 40
      %v2611 = vpop.permute.xlu0 %2610
      %2612 = vrot.lane.b32.xlu0 %v2152, 40
      %v2613 = vpop.permute.xlu0 %2612
      %2614 = vrot.lane.b32.xlu0 %v2154, 40
      %v2615 = vpop.permute.xlu0 %2614
      %2648 = vrot.lane.b32.xlu0 %v1886, 48
      %v2649 = vpop.permute.xlu0 %2648
      %2650 = vrot.lane.b32.xlu0 %v1887, 48
      %v2651 = vpop.permute.xlu0 %2650
      %2652 = vrot.lane.b32.xlu0 %v1889, 48
      %v2653 = vpop.permute.xlu0 %2652
      %2654 = vrot.lane.b32.xlu0 %v1890, 48
      %v2655 = vpop.permute.xlu0 %2654
      %2656 = vrot.lane.b32.xlu0 %v1892, 48
      %v2657 = vpop.permute.xlu0 %2656
      %2658 = vrot.lane.b32.xlu0 %v1893, 48
      %v2659 = vpop.permute.xlu0 %2658
      %2660 = vrot.lane.b32.xlu0 %v1895, 48
      %v2661 = vpop.permute.xlu0 %2660
      %2662 = vrot.lane.b32.xlu0 %v1896, 48
      %v2663 = vpop.permute.xlu0 %2662
      %2664 = vrot.lane.b32.xlu0 %v1898, 48
      %v2665 = vpop.permute.xlu0 %2664
      %2666 = vrot.lane.b32.xlu0 %v1899, 48
      %v2667 = vpop.permute.xlu0 %2666
      %2668 = vrot.lane.b32.xlu0 %v1901, 48
      %v2669 = vpop.permute.xlu0 %2668
      %2670 = vrot.lane.b32.xlu0 %v1902, 48
      %v2671 = vpop.permute.xlu0 %2670
      %2672 = vrot.lane.b32.xlu0 %v1904, 48
      %v2673 = vpop.permute.xlu0 %2672
      %2674 = vrot.lane.b32.xlu0 %v1905, 48
      %v2675 = vpop.permute.xlu0 %2674
      %2676 = vrot.lane.b32.xlu0 %v1907, 48
      %v2677 = vpop.permute.xlu0 %2676
      %2678 = vrot.lane.b32.xlu0 %v1908, 48
      %v2679 = vpop.permute.xlu0 %2678
      %2680 = vrot.lane.b32.xlu0 %v1910, 48
      %v2681 = vpop.permute.xlu0 %2680
      %2682 = vrot.lane.b32.xlu0 %v1911, 48
      %v2683 = vpop.permute.xlu0 %2682
      %2684 = vrot.lane.b32.xlu0 %v1913, 48
      %v2685 = vpop.permute.xlu0 %2684
      %2686 = vrot.lane.b32.xlu0 %v1914, 48
      %v2687 = vpop.permute.xlu0 %2686
      %2688 = vrot.lane.b32.xlu0 %v1916, 48
      %v2689 = vpop.permute.xlu0 %2688
      %2690 = vrot.lane.b32.xlu0 %v1917, 48
      %v2691 = vpop.permute.xlu0 %2690
      %2692 = vrot.lane.b32.xlu0 %v1919, 48
      %v2693 = vpop.permute.xlu0 %2692
      %2694 = vrot.lane.b32.xlu0 %v1920, 48
      %v2695 = vpop.permute.xlu0 %2694
      %2696 = vrot.lane.b32.xlu0 %v1922, 48
      %v2697 = vpop.permute.xlu0 %2696
      %2698 = vrot.lane.b32.xlu0 %v1923, 48
      %v2699 = vpop.permute.xlu0 %2698
      %2700 = vrot.lane.b32.xlu0 %v1925, 48
      %v2701 = vpop.permute.xlu0 %2700
      %2702 = vrot.lane.b32.xlu0 %v1926, 48
      %v2703 = vpop.permute.xlu0 %2702
      %2704 = vrot.lane.b32.xlu0 %v1928, 48
      %v2705 = vpop.permute.xlu0 %2704
      %2706 = vrot.lane.b32.xlu0 %v1929, 48
      %v2707 = vpop.permute.xlu0 %2706
      %2708 = vrot.lane.b32.xlu0 %v1931, 48
      %v2709 = vpop.permute.xlu0 %2708
      %2710 = vrot.lane.b32.xlu0 %v1932, 48
      %v2711 = vpop.permute.xlu0 %2710
      %2744 = vrot.lane.b32.xlu0 %v1994, 56
      %v2745 = vpop.permute.xlu0 %2744
      %2746 = vrot.lane.b32.xlu0 %v1996, 56
      %v2747 = vpop.permute.xlu0 %2746
      %2748 = vrot.lane.b32.xlu0 %v1999, 56
      %v2749 = vpop.permute.xlu0 %2748
      %2750 = vrot.lane.b32.xlu0 %v2001, 56
      %v2751 = vpop.permute.xlu0 %2750
      %2752 = vrot.lane.b32.xlu0 %v2004, 56
      %v2753 = vpop.permute.xlu0 %2752
      %2754 = vrot.lane.b32.xlu0 %v2006, 56
      %v2755 = vpop.permute.xlu0 %2754
      %2756 = vrot.lane.b32.xlu0 %v2009, 56
      %v2757 = vpop.permute.xlu0 %2756
      %2758 = vrot.lane.b32.xlu0 %v2011, 56
      %v2759 = vpop.permute.xlu0 %2758
      %2760 = vrot.lane.b32.xlu0 %v2014, 56
      %v2761 = vpop.permute.xlu0 %2760
      %2762 = vrot.lane.b32.xlu0 %v2016, 56
      %v2763 = vpop.permute.xlu0 %2762
      %2764 = vrot.lane.b32.xlu0 %v2019, 56
      %v2765 = vpop.permute.xlu0 %2764
      %2766 = vrot.lane.b32.xlu0 %v2021, 56
      %v2767 = vpop.permute.xlu0 %2766
      %2768 = vrot.lane.b32.xlu0 %v2024, 56
      %v2769 = vpop.permute.xlu0 %2768
      %2770 = vrot.lane.b32.xlu0 %v2026, 56
      %v2771 = vpop.permute.xlu0 %2770
      %2772 = vrot.lane.b32.xlu0 %v2029, 56
      %v2773 = vpop.permute.xlu0 %2772
      %2774 = vrot.lane.b32.xlu0 %v2031, 56
      %v2775 = vpop.permute.xlu0 %2774
      %2776 = vrot.lane.b32.xlu0 %v2034, 56
      %v2777 = vpop.permute.xlu0 %2776
      %2778 = vrot.lane.b32.xlu0 %v2036, 56
      %v2779 = vpop.permute.xlu0 %2778
      %2780 = vrot.lane.b32.xlu0 %v2039, 56
      %v2781 = vpop.permute.xlu0 %2780
      %2782 = vrot.lane.b32.xlu0 %v2041, 56
      %v2783 = vpop.permute.xlu0 %2782
      %2784 = vrot.lane.b32.xlu0 %v2044, 56
      %v2785 = vpop.permute.xlu0 %2784
      %2786 = vrot.lane.b32.xlu0 %v2046, 56
      %v2787 = vpop.permute.xlu0 %2786
      %2788 = vrot.lane.b32.xlu0 %v2049, 56
      %v2789 = vpop.permute.xlu0 %2788
      %2790 = vrot.lane.b32.xlu0 %v2051, 56
      %v2791 = vpop.permute.xlu0 %2790
      %2792 = vrot.lane.b32.xlu0 %v2054, 56
      %v2793 = vpop.permute.xlu0 %2792
      %2794 = vrot.lane.b32.xlu0 %v2056, 56
      %v2795 = vpop.permute.xlu0 %2794
      %2796 = vrot.lane.b32.xlu0 %v2059, 56
      %v2797 = vpop.permute.xlu0 %2796
      %2798 = vrot.lane.b32.xlu0 %v2061, 56
      %v2799 = vpop.permute.xlu0 %2798
      %2800 = vrot.lane.b32.xlu0 %v2147, 56
      %v2801 = vpop.permute.xlu0 %2800
      %2802 = vrot.lane.b32.xlu0 %v2149, 56
      %v2803 = vpop.permute.xlu0 %2802
      %2804 = vrot.lane.b32.xlu0 %v2160, 56
      %v2805 = vpop.permute.xlu0 %2804
      %2806 = vrot.lane.b32.xlu0 %v2162, 56
      %v2807 = vpop.permute.xlu0 %2806
      %2840 = vrot.lane.b32.xlu0 %v2074, 64
      %v2841 = vpop.permute.xlu0 %2840
      %2842 = vrot.lane.b32.xlu0 %v2076, 64
      %v2843 = vpop.permute.xlu0 %2842
      %2844 = vrot.lane.b32.xlu0 %v2079, 64
      %v2845 = vpop.permute.xlu0 %2844
      %2846 = vrot.lane.b32.xlu0 %v2081, 64
      %v2847 = vpop.permute.xlu0 %2846
      %2848 = vrot.lane.b32.xlu0 %v2084, 64
      %v2849 = vpop.permute.xlu0 %2848
      %2850 = vrot.lane.b32.xlu0 %v2086, 64
      %v2851 = vpop.permute.xlu0 %2850
      %2852 = vrot.lane.b32.xlu0 %v2089, 64
      %v2853 = vpop.permute.xlu0 %2852
      %2854 = vrot.lane.b32.xlu0 %v2091, 64
      %v2855 = vpop.permute.xlu0 %2854
      %2856 = vrot.lane.b32.xlu0 %v2094, 64
      %v2857 = vpop.permute.xlu0 %2856
      %2858 = vrot.lane.b32.xlu0 %v2096, 64
      %v2859 = vpop.permute.xlu0 %2858
      %2860 = vrot.lane.b32.xlu0 %v2099, 64
      %v2861 = vpop.permute.xlu0 %2860
      %2862 = vrot.lane.b32.xlu0 %v2101, 64
      %v2863 = vpop.permute.xlu0 %2862
      %2864 = vrot.lane.b32.xlu0 %v2104, 64
      %v2865 = vpop.permute.xlu0 %2864
      %2866 = vrot.lane.b32.xlu0 %v2106, 64
      %v2867 = vpop.permute.xlu0 %2866
      %2868 = vrot.lane.b32.xlu0 %v2109, 64
      %v2869 = vpop.permute.xlu0 %2868
      %2870 = vrot.lane.b32.xlu0 %v2111, 64
      %v2871 = vpop.permute.xlu0 %2870
      %2872 = vrot.lane.b32.xlu0 %v2114, 64
      %v2873 = vpop.permute.xlu0 %2872
      %2874 = vrot.lane.b32.xlu0 %v2116, 64
      %v2875 = vpop.permute.xlu0 %2874
      %2876 = vrot.lane.b32.xlu0 %v2119, 64
      %v2877 = vpop.permute.xlu0 %2876
      %2878 = vrot.lane.b32.xlu0 %v2121, 64
      %v2879 = vpop.permute.xlu0 %2878
      %2880 = vrot.lane.b32.xlu0 %v2124, 64
      %v2881 = vpop.permute.xlu0 %2880
      %2882 = vrot.lane.b32.xlu0 %v2126, 64
      %v2883 = vpop.permute.xlu0 %2882
      %2884 = vrot.lane.b32.xlu0 %v2129, 64
      %v2885 = vpop.permute.xlu0 %2884
      %2886 = vrot.lane.b32.xlu0 %v2131, 64
      %v2887 = vpop.permute.xlu0 %2886
      %2888 = vrot.lane.b32.xlu0 %v2134, 64
      %v2889 = vpop.permute.xlu0 %2888
      %2890 = vrot.lane.b32.xlu0 %v2136, 64
      %v2891 = vpop.permute.xlu0 %2890
      %2892 = vrot.lane.b32.xlu0 %v2139, 64
      %v2893 = vpop.permute.xlu0 %2892
      %2894 = vrot.lane.b32.xlu0 %v2141, 64
      %v2895 = vpop.permute.xlu0 %2894
      %2896 = vrot.lane.b32.xlu0 %v2152, 64
      %v2897 = vpop.permute.xlu0 %2896
      %2898 = vrot.lane.b32.xlu0 %v2154, 64
      %v2899 = vpop.permute.xlu0 %2898
      %2900 = vrot.lane.b32.xlu0 %v2165, 64
      %v2901 = vpop.permute.xlu0 %2900
      %2902 = vrot.lane.b32.xlu0 %v2167, 64
      %v2903 = vpop.permute.xlu0 %2902
      %v2936 = vsel %vm1316, %v1880, %v2169
      %v2937 = vsel %vm1316, %v1881, %v2171
      %v2938 = vsel %vm1316, %v1883, %v2173
      %v2939 = vsel %vm1316, %v1884, %v2175
      %v2940 = vsel %vm1316, %v1886, %v2177
      %v2941 = vsel %vm1316, %v1887, %v2179
      %v2942 = vsel %vm1316, %v1889, %v2181
      %v2943 = vsel %vm1316, %v1890, %v2183
      %v2944 = vsel %vm1316, %v1892, %v2185
      %v2945 = vsel %vm1316, %v1893, %v2187
      %v2946 = vsel %vm1316, %v1895, %v2189
      %v2947 = vsel %vm1316, %v1896, %v2191
      %v2948 = vsel %vm1316, %v1898, %v2193
      %v2949 = vsel %vm1316, %v1899, %v2195
      %v2950 = vsel %vm1316, %v1901, %v2197
      %v2951 = vsel %vm1316, %v1902, %v2199
      %v2952 = vsel %vm1316, %v1904, %v2201
      %v2953 = vsel %vm1316, %v1905, %v2203
      %v2954 = vsel %vm1316, %v1907, %v2205
      %v2955 = vsel %vm1316, %v1908, %v2207
      %v2956 = vsel %vm1316, %v1910, %v2209
      %v2957 = vsel %vm1316, %v1911, %v2211
      %v2958 = vsel %vm1316, %v1913, %v2213
      %v2959 = vsel %vm1316, %v1914, %v2215
      %v2960 = vsel %vm1316, %v1916, %v2217
      %v2961 = vsel %vm1316, %v1917, %v2219
      %v2962 = vsel %vm1316, %v1919, %v2221
      %v2963 = vsel %vm1316, %v1920, %v2223
      %v2964 = vsel %vm1316, %v1922, %v2225
      %v2965 = vsel %vm1316, %v1923, %v2227
      %v2966 = vsel %vm1316, %v1925, %v2229
      %v2967 = vsel %vm1316, %v1926, %v2231
      %v2968 = vsel %vm1382, %v2936, %v2265
      %v2969 = vsel %vm1382, %v2937, %v2267
      %v2970 = vsel %vm1382, %v2938, %v2269
      %v2971 = vsel %vm1382, %v2939, %v2271
      %v2972 = vsel %vm1382, %v2940, %v2273
      %v2973 = vsel %vm1382, %v2941, %v2275
      %v2974 = vsel %vm1382, %v2942, %v2277
      %v2975 = vsel %vm1382, %v2943, %v2279
      %v2976 = vsel %vm1382, %v2944, %v2281
      %v2977 = vsel %vm1382, %v2945, %v2283
      %v2978 = vsel %vm1382, %v2946, %v2285
      %v2979 = vsel %vm1382, %v2947, %v2287
      %v2980 = vsel %vm1382, %v2948, %v2289
      %v2981 = vsel %vm1382, %v2949, %v2291
      %v2982 = vsel %vm1382, %v2950, %v2293
      %v2983 = vsel %vm1382, %v2951, %v2295
      %v2984 = vsel %vm1382, %v2952, %v2297
      %v2985 = vsel %vm1382, %v2953, %v2299
      %v2986 = vsel %vm1382, %v2954, %v2301
      %v2987 = vsel %vm1382, %v2955, %v2303
      %v2988 = vsel %vm1382, %v2956, %v2305
      %v2989 = vsel %vm1382, %v2957, %v2307
      %v2990 = vsel %vm1382, %v2958, %v2309
      %v2991 = vsel %vm1382, %v2959, %v2311
      %v2992 = vsel %vm1382, %v2960, %v2313
      %v2993 = vsel %vm1382, %v2961, %v2315
      %v2994 = vsel %vm1382, %v2962, %v2317
      %v2995 = vsel %vm1382, %v2963, %v2319
      %v2996 = vsel %vm1382, %v2964, %v2321
      %v2997 = vsel %vm1382, %v2965, %v2323
      %v2998 = vsel %vm1382, %v2966, %v2325
      %v2999 = vsel %vm1382, %v2967, %v2327
      %v3000 = vsel %vm1448, %v2968, %v2361
      %v3001 = vsel %vm1448, %v2969, %v2363
      %v3002 = vsel %vm1448, %v2970, %v2365
      %v3003 = vsel %vm1448, %v2971, %v2367
      %v3004 = vsel %vm1448, %v2972, %v2369
      %v3005 = vsel %vm1448, %v2973, %v2371
      %v3006 = vsel %vm1448, %v2974, %v2373
      %v3007 = vsel %vm1448, %v2975, %v2375
      %v3008 = vsel %vm1448, %v2976, %v2377
      %v3009 = vsel %vm1448, %v2977, %v2379
      %v3010 = vsel %vm1448, %v2978, %v2381
      %v3011 = vsel %vm1448, %v2979, %v2383
      %v3012 = vsel %vm1448, %v2980, %v2385
      %v3013 = vsel %vm1448, %v2981, %v2387
      %v3014 = vsel %vm1448, %v2982, %v2389
      %v3015 = vsel %vm1448, %v2983, %v2391
      %v3016 = vsel %vm1448, %v2984, %v2393
      %v3017 = vsel %vm1448, %v2985, %v2395
      %v3018 = vsel %vm1448, %v2986, %v2397
      %v3019 = vsel %vm1448, %v2987, %v2399
      %v3020 = vsel %vm1448, %v2988, %v2401
      %v3021 = vsel %vm1448, %v2989, %v2403
      %v3022 = vsel %vm1448, %v2990, %v2405
      %v3023 = vsel %vm1448, %v2991, %v2407
      %v3024 = vsel %vm1448, %v2992, %v2409
      %v3025 = vsel %vm1448, %v2993, %v2411
      %v3026 = vsel %vm1448, %v2994, %v2413
      %v3027 = vsel %vm1448, %v2995, %v2415
      %v3028 = vsel %vm1448, %v2996, %v2417
      %v3029 = vsel %vm1448, %v2997, %v2419
      %v3030 = vsel %vm1448, %v2998, %v2421
      %v3031 = vsel %vm1448, %v2999, %v2423
      %v3032 = vsel %vm1514, %v3000, %v2457
      %v3033 = vsel %vm1514, %v3001, %v2459
      %v3034 = vsel %vm1514, %v3002, %v2461
      %v3035 = vsel %vm1514, %v3003, %v2463
      %v3036 = vsel %vm1514, %v3004, %v2465
      %v3037 = vsel %vm1514, %v3005, %v2467
      %v3038 = vsel %vm1514, %v3006, %v2469
      %v3039 = vsel %vm1514, %v3007, %v2471
      %v3040 = vsel %vm1514, %v3008, %v2473
      %v3041 = vsel %vm1514, %v3009, %v2475
      %v3042 = vsel %vm1514, %v3010, %v2477
      %v3043 = vsel %vm1514, %v3011, %v2479
      %v3044 = vsel %vm1514, %v3012, %v2481
      %v3045 = vsel %vm1514, %v3013, %v2483
      %v3046 = vsel %vm1514, %v3014, %v2485
      %v3047 = vsel %vm1514, %v3015, %v2487
      %v3048 = vsel %vm1514, %v3016, %v2489
      %v3049 = vsel %vm1514, %v3017, %v2491
      %v3050 = vsel %vm1514, %v3018, %v2493
      %v3051 = vsel %vm1514, %v3019, %v2495
      %v3052 = vsel %vm1514, %v3020, %v2497
      %v3053 = vsel %vm1514, %v3021, %v2499
      %v3054 = vsel %vm1514, %v3022, %v2501
      %v3055 = vsel %vm1514, %v3023, %v2503
      %v3056 = vsel %vm1514, %v3024, %v2505
      %v3057 = vsel %vm1514, %v3025, %v2507
      %v3058 = vsel %vm1514, %v3026, %v2509
      %v3059 = vsel %vm1514, %v3027, %v2511
      %v3060 = vsel %vm1514, %v3028, %v2513
      %v3061 = vsel %vm1514, %v3029, %v2515
      %v3062 = vsel %vm1514, %v3030, %v2517
      %v3063 = vsel %vm1514, %v3031, %v2519
      %vm3064 = vcmask 326656
      %v3065 = vsel %vm3064, %v3032, %v2553
      %v3066 = vsel %vm3064, %v3033, %v2555
      %v3067 = vsel %vm3064, %v3034, %v2557
      %v3068 = vsel %vm3064, %v3035, %v2559
      %v3069 = vsel %vm3064, %v3036, %v2561
      %v3070 = vsel %vm3064, %v3037, %v2563
      %v3071 = vsel %vm3064, %v3038, %v2565
      %v3072 = vsel %vm3064, %v3039, %v2567
      %v3073 = vsel %vm3064, %v3040, %v2569
      %v3074 = vsel %vm3064, %v3041, %v2571
      %v3075 = vsel %vm3064, %v3042, %v2573
      %v3076 = vsel %vm3064, %v3043, %v2575
      %v3077 = vsel %vm3064, %v3044, %v2577
      %v3078 = vsel %vm3064, %v3045, %v2579
      %v3079 = vsel %vm3064, %v3046, %v2581
      %v3080 = vsel %vm3064, %v3047, %v2583
      %v3081 = vsel %vm3064, %v3048, %v2585
      %v3082 = vsel %vm3064, %v3049, %v2587
      %v3083 = vsel %vm3064, %v3050, %v2589
      %v3084 = vsel %vm3064, %v3051, %v2591
      %v3085 = vsel %vm3064, %v3052, %v2593
      %v3086 = vsel %vm3064, %v3053, %v2595
      %v3087 = vsel %vm3064, %v3054, %v2597
      %v3088 = vsel %vm3064, %v3055, %v2599
      %v3089 = vsel %vm3064, %v3056, %v2601
      %v3090 = vsel %vm3064, %v3057, %v2603
      %v3091 = vsel %vm3064, %v3058, %v2605
      %v3092 = vsel %vm3064, %v3059, %v2607
      %v3093 = vsel %vm3064, %v3060, %v2609
      %v3094 = vsel %vm3064, %v3061, %v2611
      %v3095 = vsel %vm3064, %v3062, %v2613
      %v3096 = vsel %vm3064, %v3063, %v2615
      %vm3097 = vcmask 392192
      %v3098 = vsel %vm3097, %v3065, %v2649
      %v3099 = vsel %vm3097, %v3066, %v2651
      %v3100 = vsel %vm3097, %v3067, %v2653
      %v3101 = vsel %vm3097, %v3068, %v2655
      %v3102 = vsel %vm3097, %v3069, %v2657
      %v3103 = vsel %vm3097, %v3070, %v2659
      %v3104 = vsel %vm3097, %v3071, %v2661
      %v3105 = vsel %vm3097, %v3072, %v2663
      %v3106 = vsel %vm3097, %v3073, %v2665
      %v3107 = vsel %vm3097, %v3074, %v2667
      %v3108 = vsel %vm3097, %v3075, %v2669
      %v3109 = vsel %vm3097, %v3076, %v2671
      %v3110 = vsel %vm3097, %v3077, %v2673
      %v3111 = vsel %vm3097, %v3078, %v2675
      %v3112 = vsel %vm3097, %v3079, %v2677
      %v3113 = vsel %vm3097, %v3080, %v2679
      %v3114 = vsel %vm3097, %v3081, %v2681
      %v3115 = vsel %vm3097, %v3082, %v2683
      %v3116 = vsel %vm3097, %v3083, %v2685
      %v3117 = vsel %vm3097, %v3084, %v2687
      %v3118 = vsel %vm3097, %v3085, %v2689
      %v3119 = vsel %vm3097, %v3086, %v2691
      %v3120 = vsel %vm3097, %v3087, %v2693
      %v3121 = vsel %vm3097, %v3088, %v2695
      %v3122 = vsel %vm3097, %v3089, %v2697
      %v3123 = vsel %vm3097, %v3090, %v2699
      %v3124 = vsel %vm3097, %v3091, %v2701
      %v3125 = vsel %vm3097, %v3092, %v2703
      %v3126 = vsel %vm3097, %v3093, %v2705
      %v3127 = vsel %vm3097, %v3094, %v2707
      %v3128 = vsel %vm3097, %v3095, %v2709
      %v3129 = vsel %vm3097, %v3096, %v2711
      %vm3130 = vcmask 457728
      %v3131 = vsel %vm3130, %v3098, %v2745
      %v3132 = vsel %vm3130, %v3099, %v2747
      %v3133 = vsel %vm3130, %v3100, %v2749
      %v3134 = vsel %vm3130, %v3101, %v2751
      %v3135 = vsel %vm3130, %v3102, %v2753
      %v3136 = vsel %vm3130, %v3103, %v2755
      %v3137 = vsel %vm3130, %v3104, %v2757
      %v3138 = vsel %vm3130, %v3105, %v2759
      %v3139 = vsel %vm3130, %v3106, %v2761
      %v3140 = vsel %vm3130, %v3107, %v2763
      %v3141 = vsel %vm3130, %v3108, %v2765
      %v3142 = vsel %vm3130, %v3109, %v2767
      %v3143 = vsel %vm3130, %v3110, %v2769
      %v3144 = vsel %vm3130, %v3111, %v2771
      %v3145 = vsel %vm3130, %v3112, %v2773
      %v3146 = vsel %vm3130, %v3113, %v2775
      %v3147 = vsel %vm3130, %v3114, %v2777
      %v3148 = vsel %vm3130, %v3115, %v2779
      %v3149 = vsel %vm3130, %v3116, %v2781
      %v3150 = vsel %vm3130, %v3117, %v2783
      %v3151 = vsel %vm3130, %v3118, %v2785
      %v3152 = vsel %vm3130, %v3119, %v2787
      %v3153 = vsel %vm3130, %v3120, %v2789
      %v3154 = vsel %vm3130, %v3121, %v2791
      %v3155 = vsel %vm3130, %v3122, %v2793
      %v3156 = vsel %vm3130, %v3123, %v2795
      %v3157 = vsel %vm3130, %v3124, %v2797
      %v3158 = vsel %vm3130, %v3125, %v2799
      %v3159 = vsel %vm3130, %v3126, %v2801
      %v3160 = vsel %vm3130, %v3127, %v2803
      %v3161 = vsel %vm3130, %v3128, %v2805
      %v3162 = vsel %vm3130, %v3129, %v2807
      %vm3163 = vcmask 523264
      %v3164 = vsel %vm3163, %v3131, %v2841
      %v3165 = vsel %vm3163, %v3132, %v2843
      %v3166 = vsel %vm3163, %v3133, %v2845
      %v3167 = vsel %vm3163, %v3134, %v2847
      %v3168 = vsel %vm3163, %v3135, %v2849
      %v3169 = vsel %vm3163, %v3136, %v2851
      %v3170 = vsel %vm3163, %v3137, %v2853
      %v3171 = vsel %vm3163, %v3138, %v2855
      %v3172 = vsel %vm3163, %v3139, %v2857
      %v3173 = vsel %vm3163, %v3140, %v2859
      %v3174 = vsel %vm3163, %v3141, %v2861
      %v3175 = vsel %vm3163, %v3142, %v2863
      %v3176 = vsel %vm3163, %v3143, %v2865
      %v3177 = vsel %vm3163, %v3144, %v2867
      %v3178 = vsel %vm3163, %v3145, %v2869
      %v3179 = vsel %vm3163, %v3146, %v2871
      %v3180 = vsel %vm3163, %v3147, %v2873
      %v3181 = vsel %vm3163, %v3148, %v2875
      %v3182 = vsel %vm3163, %v3149, %v2877
      %v3183 = vsel %vm3163, %v3150, %v2879
      %v3184 = vsel %vm3163, %v3151, %v2881
      %v3185 = vsel %vm3163, %v3152, %v2883
      %v3186 = vsel %vm3163, %v3153, %v2885
      %v3187 = vsel %vm3163, %v3154, %v2887
      %v3188 = vsel %vm3163, %v3155, %v2889
      %v3189 = vsel %vm3163, %v3156, %v2891
      %v3190 = vsel %vm3163, %v3157, %v2893
      %v3191 = vsel %vm3163, %v3158, %v2895
      %v3192 = vsel %vm3163, %v3159, %v2897
      %v3193 = vsel %vm3163, %v3160, %v2899
      %v3194 = vsel %vm3163, %v3161, %v2901
      %v3195 = vsel %vm3163, %v3162, %v2903
      %v3196 = vld [vmem:[%s3] sm:$0xff]
      %v3197 = vld [vmem:[%s3 + $0x8] sm:$0xff]
      %v3198 = vld [vmem:[%s3 + $0x10] sm:$0xff]
      %v3199 = vld [vmem:[%s3 + $0x18] sm:$0xff]
      %v3200 = vld [vmem:[%s3 + $0x20] sm:$0xff]
      %v3201 = vld [vmem:[%s3 + $0x28] sm:$0xff]
      %v3202 = vld [vmem:[%s3 + $0x30] sm:$0xff]
      %v3203 = vld [vmem:[%s3 + $0x38] sm:$0xff]
      %v3204 = vld [vmem:[%s3 + $0x40] sm:$0xff]
      %v3205 = vld [vmem:[%s4] sm:$0x1]
      %v3207 = vperm.slane %v3205, 0
      %vm3209 = vcmask 588800
      %v3211 = vsel %vm3209, %v3164, 0
      %v3214 = vsel %vm3209, %v3165, 0
      %v3217 = vsel %vm3209, %v3166, 0
      %v3220 = vsel %vm3209, %v3167, 0
      %v3223 = vsel %vm3209, %v3168, 0
      %v3226 = vsel %vm3209, %v3169, 0
      %v3229 = vsel %vm3209, %v3170, 0
      %v3232 = vsel %vm3209, %v3171, 0
      %v3235 = vsel %vm3209, %v3172, 0
      %v3238 = vsel %vm3209, %v3173, 0
      %v3241 = vsel %vm3209, %v3174, 0
      %v3244 = vsel %vm3209, %v3175, 0
      %v3247 = vsel %vm3209, %v3176, 0
      %v3250 = vsel %vm3209, %v3177, 0
      %v3253 = vsel %vm3209, %v3178, 0
      %v3256 = vsel %vm3209, %v3179, 0
      %v3259 = vsel %vm3209, %v3180, 0
      %v3262 = vsel %vm3209, %v3181, 0
      %v3265 = vsel %vm3209, %v3182, 0
      %v3268 = vsel %vm3209, %v3183, 0
      %v3271 = vsel %vm3209, %v3184, 0
      %v3274 = vsel %vm3209, %v3185, 0
      %v3277 = vsel %vm3209, %v3186, 0
      %v3280 = vsel %vm3209, %v3187, 0
      %v3283 = vsel %vm3209, %v3188, 0
      %v3286 = vsel %vm3209, %v3189, 0
      %v3289 = vsel %vm3209, %v3190, 0
      %v3292 = vsel %vm3209, %v3191, 0
      %v3295 = vsel %vm3209, %v3192, 0
      %v3298 = vsel %vm3209, %v3193, 0
      %v3301 = vsel %vm3209, %v3194, 0
      %v3304 = vsel %vm3209, %v3195, 0
      %3306 = vmatpush.msra.mxu0 0.0
      %3307 = vmatpush.msra.mxu0 0.0
      %3308 = vmatpush.msra.mxu0 0.0
      %3309 = vmatpush.msra.mxu0 0.0
      %3310 = vmatpush.msra.mxu0 0.0
      %3311 = vmatpush.msra.mxu0 0.0
      %3312 = vmatpush.msra.mxu0 0.0
      %3313 = vmatpush.msra.mxu0 %v3204
      %3314 = vmatpush.msra.mxu0 %v3203
      %3315 = vmatpush.msra.mxu0 %v3202
      %3316 = vmatpush.msra.mxu0 %v3201
      %3317 = vmatpush.msra.mxu0 %v3200
      %3318 = vmatpush.msra.mxu0 %v3199
      %3319 = vmatpush.msra.mxu0 %v3198
      %3320 = vmatpush.msra.mxu0 %v3197
      %3321 = vmatpush.msra.mxu0 %v3196
      %3322 = vmatmul.f32.gmra.mxu0 %v3211
      %v3323 = vpop.f32.mrf.mxu0
      %v3324 = vadd.f32 %v3207, %v3323
      %3325 = vmatmul.f32.gmra.mxu0 %v3214
      %v3326 = vpop.f32.mrf.mxu0
      %v3327 = vadd.f32 %v3207, %v3326
      %3328 = vmatmul.f32.gmra.mxu0 %v3217
      %v3329 = vpop.f32.mrf.mxu0
      %v3330 = vadd.f32 %v3207, %v3329
      %3331 = vmatmul.f32.gmra.mxu0 %v3220
      %v3332 = vpop.f32.mrf.mxu0
      %v3333 = vadd.f32 %v3207, %v3332
      %3334 = vmatmul.f32.gmra.mxu0 %v3223
      %v3335 = vpop.f32.mrf.mxu0
      %v3336 = vadd.f32 %v3207, %v3335
      %3337 = vmatmul.f32.gmra.mxu0 %v3226
      %v3338 = vpop.f32.mrf.mxu0
      %v3339 = vadd.f32 %v3207, %v3338
      %3340 = vmatmul.f32.gmra.mxu0 %v3229
      %v3341 = vpop.f32.mrf.mxu0
      %v3342 = vadd.f32 %v3207, %v3341
      %3343 = vmatmul.f32.gmra.mxu0 %v3232
      %v3344 = vpop.f32.mrf.mxu0
      %v3345 = vadd.f32 %v3207, %v3344
      %3346 = vmatmul.f32.gmra.mxu0 %v3235
      %v3347 = vpop.f32.mrf.mxu0
      %v3348 = vadd.f32 %v3207, %v3347
      %3349 = vmatmul.f32.gmra.mxu0 %v3238
      %v3350 = vpop.f32.mrf.mxu0
      %v3351 = vadd.f32 %v3207, %v3350
      %3352 = vmatmul.f32.gmra.mxu0 %v3241
      %v3353 = vpop.f32.mrf.mxu0
      %v3354 = vadd.f32 %v3207, %v3353
      %3355 = vmatmul.f32.gmra.mxu0 %v3244
      %v3356 = vpop.f32.mrf.mxu0
      %v3357 = vadd.f32 %v3207, %v3356
      %3358 = vmatmul.f32.gmra.mxu0 %v3247
      %v3359 = vpop.f32.mrf.mxu0
      %v3360 = vadd.f32 %v3207, %v3359
      %3361 = vmatmul.f32.gmra.mxu0 %v3250
      %v3362 = vpop.f32.mrf.mxu0
      %v3363 = vadd.f32 %v3207, %v3362
      %3364 = vmatmul.f32.gmra.mxu0 %v3253
      %v3365 = vpop.f32.mrf.mxu0
      %v3366 = vadd.f32 %v3207, %v3365
      %3367 = vmatmul.f32.gmra.mxu0 %v3256
      %v3368 = vpop.f32.mrf.mxu0
      %v3369 = vadd.f32 %v3207, %v3368
      %3370 = vmatmul.f32.gmra.mxu0 %v3259
      %v3371 = vpop.f32.mrf.mxu0
      %v3372 = vadd.f32 %v3207, %v3371
      %3373 = vmatmul.f32.gmra.mxu0 %v3262
      %v3374 = vpop.f32.mrf.mxu0
      %v3375 = vadd.f32 %v3207, %v3374
      %3376 = vmatmul.f32.gmra.mxu0 %v3265
      %v3377 = vpop.f32.mrf.mxu0
      %v3378 = vadd.f32 %v3207, %v3377
      %3379 = vmatmul.f32.gmra.mxu0 %v3268
      %v3380 = vpop.f32.mrf.mxu0
      %v3381 = vadd.f32 %v3207, %v3380
      %3382 = vmatmul.f32.gmra.mxu0 %v3271
      %v3383 = vpop.f32.mrf.mxu0
      %v3384 = vadd.f32 %v3207, %v3383
      %3385 = vmatmul.f32.gmra.mxu0 %v3274
      %v3386 = vpop.f32.mrf.mxu0
      %v3387 = vadd.f32 %v3207, %v3386
      %3388 = vmatmul.f32.gmra.mxu0 %v3277
      %v3389 = vpop.f32.mrf.mxu0
      %v3390 = vadd.f32 %v3207, %v3389
      %3391 = vmatmul.f32.gmra.mxu0 %v3280
      %v3392 = vpop.f32.mrf.mxu0
      %v3393 = vadd.f32 %v3207, %v3392
      %3394 = vmatmul.f32.gmra.mxu0 %v3283
      %v3395 = vpop.f32.mrf.mxu0
      %v3396 = vadd.f32 %v3207, %v3395
      %3397 = vmatmul.f32.gmra.mxu0 %v3286
      %v3398 = vpop.f32.mrf.mxu0
      %v3399 = vadd.f32 %v3207, %v3398
      %3400 = vmatmul.f32.gmra.mxu0 %v3289
      %v3401 = vpop.f32.mrf.mxu0
      %v3402 = vadd.f32 %v3207, %v3401
      %3403 = vmatmul.f32.gmra.mxu0 %v3292
      %v3404 = vpop.f32.mrf.mxu0
      %v3405 = vadd.f32 %v3207, %v3404
      %3406 = vmatmul.f32.gmra.mxu0 %v3295
      %v3407 = vpop.f32.mrf.mxu0
      %v3408 = vadd.f32 %v3207, %v3407
      %3409 = vmatmul.f32.gmra.mxu0 %v3298
      %v3410 = vpop.f32.mrf.mxu0
      %v3411 = vadd.f32 %v3207, %v3410
      %3412 = vmatmul.f32.gmra.mxu0 %v3301
      %v3413 = vpop.f32.mrf.mxu0
      %v3414 = vadd.f32 %v3207, %v3413
      %3415 = vmatmul.f32.gmra.mxu0 %v3304
      %v3416 = vpop.f32.mrf.mxu0
      %v3417 = vadd.f32 %v3207, %v3416
      %3418 = vdwg.mxu0
      %v3419 = vmax.f32 %v3324, 0.0
      %v3420 = vmax.f32 %v3327, 0.0
      %v3421 = vmax.f32 %v3330, 0.0
      %v3422 = vmax.f32 %v3333, 0.0
      %v3423 = vmax.f32 %v3336, 0.0
      %v3424 = vmax.f32 %v3339, 0.0
      %v3425 = vmax.f32 %v3342, 0.0
      %v3426 = vmax.f32 %v3345, 0.0
      %v3427 = vmax.f32 %v3348, 0.0
      %v3428 = vmax.f32 %v3351, 0.0
      %v3429 = vmax.f32 %v3354, 0.0
      %v3430 = vmax.f32 %v3357, 0.0
      %v3431 = vmax.f32 %v3360, 0.0
      %v3432 = vmax.f32 %v3363, 0.0
      %v3433 = vmax.f32 %v3366, 0.0
      %v3434 = vmax.f32 %v3369, 0.0
      %v3435 = vmax.f32 %v3372, 0.0
      %v3436 = vmax.f32 %v3375, 0.0
      %v3437 = vmax.f32 %v3378, 0.0
      %v3438 = vmax.f32 %v3381, 0.0
      %v3439 = vmax.f32 %v3384, 0.0
      %v3440 = vmax.f32 %v3387, 0.0
      %v3441 = vmax.f32 %v3390, 0.0
      %v3442 = vmax.f32 %v3393, 0.0
      %v3443 = vmax.f32 %v3396, 0.0
      %v3444 = vmax.f32 %v3399, 0.0
      %v3445 = vmax.f32 %v3402, 0.0
      %v3446 = vmax.f32 %v3405, 0.0
      %v3447 = vmax.f32 %v3408, 0.0
      %v3448 = vmax.f32 %v3411, 0.0
      %v3449 = vmax.f32 %v3414, 0.0
      %v3450 = vmax.f32 %v3417, 0.0
      %3451 = vst.msk [vmem:[%s224] sm:$0xff] %vm1316, %v3419
      %3452 = vst.msk [vmem:[%s224 + $0x8] sm:$0xff] %vm1316, %v3420
      %3453 = vst.msk [vmem:[%s224 + $0x10] sm:$0xff] %vm1316, %v3421
      %3454 = vst.msk [vmem:[%s224 + $0x18] sm:$0xff] %vm1316, %v3422
      %3455 = vst.msk [vmem:[%s224 + $0x20] sm:$0xff] %vm1316, %v3423
      %3456 = vst.msk [vmem:[%s224 + $0x28] sm:$0xff] %vm1316, %v3424
      %3457 = vst.msk [vmem:[%s224 + $0x30] sm:$0xff] %vm1316, %v3425
      %3458 = vst.msk [vmem:[%s224 + $0x38] sm:$0xff] %vm1316, %v3426
      %3459 = vst.msk [vmem:[%s224 + $0x40] sm:$0xff] %vm1316, %v3427
      %3460 = vst.msk [vmem:[%s224 + $0x48] sm:$0xff] %vm1316, %v3428
      %3461 = vst.msk [vmem:[%s224 + $0x50] sm:$0xff] %vm1316, %v3429
      %3462 = vst.msk [vmem:[%s224 + $0x58] sm:$0xff] %vm1316, %v3430
      %3463 = vst.msk [vmem:[%s224 + $0x60] sm:$0xff] %vm1316, %v3431
      %3464 = vst.msk [vmem:[%s224 + $0x68] sm:$0xff] %vm1316, %v3432
      %3465 = vst.msk [vmem:[%s224 + $0x70] sm:$0xff] %vm1316, %v3433
      %3466 = vst.msk [vmem:[%s224 + $0x78] sm:$0xff] %vm1316, %v3434
      %3467 = vst.msk [vmem:[%s224 + $0x80] sm:$0xff] %vm1316, %v3435
      %3468 = vst.msk [vmem:[%s224 + $0x88] sm:$0xff] %vm1316, %v3436
      %3469 = vst.msk [vmem:[%s224 + $0x90] sm:$0xff] %vm1316, %v3437
      %3470 = vst.msk [vmem:[%s224 + $0x98] sm:$0xff] %vm1316, %v3438
      %3471 = vst.msk [vmem:[%s224 + $0xa0] sm:$0xff] %vm1316, %v3439
      %3472 = vst.msk [vmem:[%s224 + $0xa8] sm:$0xff] %vm1316, %v3440
      %3473 = vst.msk [vmem:[%s224 + $0xb0] sm:$0xff] %vm1316, %v3441
      %3474 = vst.msk [vmem:[%s224 + $0xb8] sm:$0xff] %vm1316, %v3442
      %3475 = vst.msk [vmem:[%s224 + $0xc0] sm:$0xff] %vm1316, %v3443
      %3476 = vst.msk [vmem:[%s224 + $0xc8] sm:$0xff] %vm1316, %v3444
      %3477 = vst.msk [vmem:[%s224 + $0xd0] sm:$0xff] %vm1316, %v3445
      %3478 = vst.msk [vmem:[%s224 + $0xd8] sm:$0xff] %vm1316, %v3446
      %3479 = vst.msk [vmem:[%s224 + $0xe0] sm:$0xff] %vm1316, %v3447
      %3480 = vst.msk [vmem:[%s224 + $0xe8] sm:$0xff] %vm1316, %v3448
      %3481 = vst.msk [vmem:[%s224 + $0xf0] sm:$0xff] %vm1316, %v3449
      %3482 = vst.msk [vmem:[%s224 + $0xf8] sm:$0xff] %vm1316, %v3450
      %p3483 = scmp.lt.s32.totalorder %s16, 1
      %s3484 = scalar_select %p3483, %s16, 1
      %s3485 = smul.addr %s3484, 32
      %s3486 = smul.addr %s3485, 8
      %s3487 = scalar_lea.vmem %s5, %s3486
      // Predicated region
      $region41: #{double_conv.1} parent=39 // pred_check
        %p3488 = pneg %p144
      $region42: #{double_conv.1} parent=39 // pred_check_branch
        %3490 = sbr.rel (%p3488) target = $region44
      $region43: #{double_conv.1} parent=39 // pred_region
        _
      $region44: #{double_conv.1} parent=39 // pred_fallthru
        _
    $region40: #{double_conv.1} parent=5 // pred_fallthru
      _
    %p3491 = scmp.le.s32.totalorder 2, %s11
    // Predicated region
    $region45: #{double_conv.1} parent=5 // pred_check
      %p3492 = pneg %p3491
    $region46: #{double_conv.1} parent=5 // pred_check_branch
      %3494 = sbr.rel (%p3492) target = $region48
    $region47: #{double_conv.1} parent=5 // pred_region
      %s3495 = ssub.s32 %s11, 2
      // Predicated region
      $region49: #{double_conv.1} parent=47 // pred_check
        %p3496 = pneg %p150
      $region50: #{double_conv.1} parent=47 // pred_check_branch
        %3498 = sbr.rel (%p3496) target = $region52
      $region51: #{double_conv.1} parent=47 // pred_region
        %p3499 = scmp.lt.s32.totalorder %s17, 1
        %s3500 = scalar_select %p3499, %s17, 1
        %s3501 = smul.addr %s3500, 32
        %s3502 = smul.addr %s3501, 8
        %s3503 = scalar_lea.vmem %s5, %s3502
      $region52: #{double_conv.1} parent=47 // pred_fallthru
        _
    $region48: #{double_conv.1} parent=5 // pred_fallthru
      _
  $region6: #{double_conv.1} parent=0 // loop_footer
    %s15 = sadd.s32 1, %s11
  $region7: #{double_conv.1} parent=0 // loop_footer_branch
    %10 = sbr.rel target = $region3
  $region8: #{double_conv.1} parent=0 // loop_exit
    _

</llo_original>
